<compile_context>
chip_gen: v7x
topology: tpu7x:2x2x1
jax: 0.10.0
libtpu: 0.0.40
codegen_flags: <defaults>
</compile_context>

<pallas_src>
import functools

import jax
import jax.numpy as jnp
from jax.experimental import pallas as pl
from jax.experimental.pallas import tpu as pltpu

NEIGHBOR_K = 3


def _dn4_kernel(q_ref, s_ref, out_ref, *, nc, m, m_pad, k):
    # q_ref  : (1, HW, C)        per-query block (pipelined over the B grid)
    # s_ref  : (C, NC * Mpad)    pre-normalized, lane-padded, fused support bank
    # out_ref: (1, 1, NC)        per-query output row
    q = q_ref[0]                                                      # (HW, C)
    qn = q * jax.lax.rsqrt(jnp.sum(q * q, axis=1, keepdims=True))     # row L2 norm

    # One fused MXU matmul for all classes: (HW, C) @ (C, NC*Mpad).
    ip = jnp.dot(qn, s_ref[...], preferred_element_type=jnp.float32)  # (HW, NC*Mpad)

    hw = q.shape[0]
    col = jax.lax.broadcasted_iota(jnp.int32, (hw, m_pad), 1)         # hoisted
    pad_mask = col < m
    class_iota = jax.lax.broadcasted_iota(jnp.int32, (1, nc), 1)      # hoisted
    neg_inf = jnp.float32(-jnp.inf)
    big = jnp.int32(2 ** 30)

    row = jnp.zeros((1, nc), jnp.float32)
    for j in range(nc):                                               # static, small
        # 128-aligned static lane slice of the fused similarity matrix.
        cur = jnp.where(pad_mask, ip[:, j * m_pad:(j + 1) * m_pad], neg_inf)
        total = jnp.zeros((hw, 1), jnp.float32)
        # top-k (k=3) per row via iterative max; mask only the FIRST occurrence
        # of the max each round so ties behave like torch.topk.
        for _ in range(k):
            mx = jnp.max(cur, axis=1, keepdims=True)                  # (HW, 1)
            amx = jnp.min(jnp.where(cur == mx, col, big),
                          axis=1, keepdims=True)                      # (HW, 1)
            total = total + mx
            cur = jnp.where(col == amx, neg_inf, cur)
        cls_sum = jnp.sum(total, keepdims=True)                       # (1, 1)
        row = jnp.where(class_iota == j, cls_sum, row)                # place in lane j
    out_ref[0] = row                                                  # single store


def img_to_class_metric(x1, x2, neighbor_k=NEIGHBOR_K):
    B, C, H, W = x1.shape
    NC, C2, M = x2.shape
    assert C == C2
    HW = H * W

    q = jnp.transpose(x1.reshape(B, C, HW), (0, 2, 1)).astype(jnp.float32)  # (B, HW, C)

    # Pre-normalize the support bank once (class-constant work), pad each class's
    # M descriptors to a lane multiple and fuse classes along lanes:
    # (NC, C, M) -> (C, NC * Mpad).
    x2f = x2.astype(jnp.float32)
    sn = x2f * jax.lax.rsqrt(jnp.sum(x2f * x2f, axis=1, keepdims=True))     # (NC, C, M)
    m_pad = ((M + 127) // 128) * 128
    sn = jnp.pad(sn, ((0, 0), (0, 0), (0, m_pad - M)))                      # (NC, C, Mpad)
    s_fused = jnp.transpose(sn, (1, 0, 2)).reshape(C, NC * m_pad)           # (C, NC*Mpad)

    kernel = functools.partial(_dn4_kernel, nc=NC, m=M, m_pad=m_pad, k=neighbor_k)
    out = pl.pallas_call(
        kernel,
        out_shape=jax.ShapeDtypeStruct((B, 1, NC), jnp.float32),
        grid_spec=pl.GridSpec(
            grid=(B,),
            in_specs=[
                pl.BlockSpec((1, HW, C), lambda i: (i, 0, 0)),       # per-query block
                pl.BlockSpec((C, NC * m_pad), lambda i: (0, 0)),     # fused support bank
            ],
            out_specs=pl.BlockSpec((1, 1, NC), lambda i: (i, 0, 0)),  # per-step row
        ),
        compiler_params=pltpu.CompilerParams(
            dimension_semantics=("parallel",),
            vmem_limit_bytes=32 * 1024 * 1024),
    )(q, s_fused)
    return out[:, 0, :]


def _reference(x1, x2, k):
    B, C, H, W = x1.shape
    q = jnp.transpose(x1.reshape(B, C, H * W), (0, 2, 1))
    qn = q / jnp.linalg.norm(q, axis=2, keepdims=True)
    sn = x2 / jnp.linalg.norm(x2, axis=1, keepdims=True)
    ip = jnp.einsum("bqc,jcm->bjqm", qn, sn)
    topv, _ = jax.lax.top_k(ip, k)
    return jnp.sum(topv, axis=(2, 3))


if __name__ == "__main__":
    key = jax.random.PRNGKey(0)
    k1, k2 = jax.random.split(key)
    B, C, H, W = 2, 64, 5, 5            # queries: (B, C, h, w) as in PyTorch
    NC, M = 5, 75                       # 5 classes, 3 shots * 25 descriptors each
    x1 = jax.random.normal(k1, (B, C, H, W), dtype=jnp.float32)
    x2 = jax.random.normal(k2, (NC, C, M), dtype=jnp.float32)

    out = img_to_class_metric(x1, x2)
    out = jax.block_until_ready(out)

    ref = _reference(x1, x2, NEIGHBOR_K)
    assert out.shape == (B, NC)
    assert jnp.allclose(out, ref, rtol=1e-3, atol=1e-2), (out, ref)
    print("KERNEL_OK")
</pallas_src>

<mosaic_0001>
module attributes {stable_mosaic.version = 11 : i64} {
  func.func @_dn4_kernel(%arg0: i32, %arg1: memref<1x25x64xf32, #tpu.memory_space<vmem>>, %arg2: memref<64x640xf32, #tpu.memory_space<vmem>>, %arg3: memref<1x1x5xf32, #tpu.memory_space<vmem>>) attributes {dimension_semantics = [#tpu.dimension_semantics<parallel>], iteration_bounds = array<i64: 2>, scalar_prefetch = 0 : i64, scratch_operands = 0 : i64, tpu.core_type = #tpu.core_type<tc>, window_params = [{transform_indices = @transform_0, window_bounds = array<i64: 1, 25, 64>}, {pipeline_mode = #tpu.pipeline_mode<synchronous>, transform_indices = @transform_1, window_bounds = array<i64: 64, 640>}, {transform_indices = @transform_2, window_bounds = array<i64: 1, 1, 5>}]} {
    %c0 = arith.constant 0 : index
    %c0_0 = arith.constant 0 : index
    %c0_1 = arith.constant 0 : index
    %0 = vector.load %arg1[%c0, %c0_0, %c0_1] : memref<1x25x64xf32, #tpu.memory_space<vmem>>, vector<1x25x64xf32>
    %1 = vector.shape_cast %0 : vector<1x25x64xf32> to vector<25x64xf32>
    %2 = arith.mulf %1, %1 : vector<25x64xf32>
    %cst = arith.constant dense<0.000000e+00> : vector<25xf32>
    %3 = vector.multi_reduction <add>, %2, %cst [1] : vector<25x64xf32> to vector<25xf32>
    %4 = vector.shape_cast %3 : vector<25xf32> to vector<25x1xf32>
    %5 = math.rsqrt %4 : vector<25x1xf32>
    %6 = vector.broadcast %5 : vector<25x1xf32> to vector<25x64xf32>
    %7 = arith.mulf %1, %6 : vector<25x64xf32>
    %c0_2 = arith.constant 0 : index
    %c0_3 = arith.constant 0 : index
    %8 = vector.load %arg2[%c0_2, %c0_3] : memref<64x640xf32, #tpu.memory_space<vmem>>, vector<64x640xf32>
    %cst_4 = arith.constant dense<0.000000e+00> : vector<25x640xf32>
    %9 = tpu.matmul %7, %8, %cst_4 {dimension_numbers = #tpu.dot_dimension_numbers<[1], [0], [0], [1], [0, 0, 1, 1], [], []>} : vector<25x64xf32>, vector<64x640xf32>, vector<25x640xf32> -> vector<25x640xf32>
    %10 = tpu.iota {dimensions = array<i32: 1>} : vector<25x128xi32>
    %c75_i32 = arith.constant 75 : i32
    %11 = vector.broadcast %c75_i32 : i32 to vector<25x128xi32>
    %12 = arith.cmpi slt, %10, %11 : vector<25x128xi32>
    %13 = tpu.iota {dimensions = array<i32: 1>} : vector<1x5xi32>
    %cst_5 = arith.constant 0.000000e+00 : f32
    %14 = vector.broadcast %cst_5 : f32 to vector<1x5xf32>
    %15 = vector.extract_strided_slice %9 {offsets = [0, 0], sizes = [25, 128], strides = [1, 1]} : vector<25x640xf32> to vector<25x128xf32>
    %cst_6 = arith.constant 0xFF800000 : f32
    %16 = vector.broadcast %cst_6 : f32 to vector<25x128xf32>
    %17 = arith.select %12, %15, %16 : vector<25x128xi1>, vector<25x128xf32>
    %cst_7 = arith.constant 0.000000e+00 : f32
    %18 = vector.broadcast %cst_7 : f32 to vector<25x1xf32>
    %cst_8 = arith.constant dense<0xFF800000> : vector<25xf32>
    %19 = vector.multi_reduction <maximumf>, %17, %cst_8 [1] : vector<25x128xf32> to vector<25xf32>
    %20 = vector.shape_cast %19 : vector<25xf32> to vector<25x1xf32>
    %21 = vector.broadcast %20 : vector<25x1xf32> to vector<25x128xf32>
    %22 = arith.cmpf oeq, %17, %21 : vector<25x128xf32>
    %c1073741824_i32 = arith.constant 1073741824 : i32
    %23 = vector.broadcast %c1073741824_i32 : i32 to vector<25x128xi32>
    %24 = arith.select %22, %10, %23 : vector<25x128xi1>, vector<25x128xi32>
    %cst_9 = arith.constant dense<2147483647> : vector<25xi32>
    %25 = vector.multi_reduction <minsi>, %24, %cst_9 [1] : vector<25x128xi32> to vector<25xi32>
    %26 = vector.shape_cast %25 : vector<25xi32> to vector<25x1xi32>
    %27 = arith.addf %18, %20 : vector<25x1xf32>
    %28 = vector.broadcast %26 : vector<25x1xi32> to vector<25x128xi32>
    %29 = arith.cmpi eq, %10, %28 : vector<25x128xi32>
    %cst_10 = arith.constant 0xFF800000 : f32
    %30 = vector.broadcast %cst_10 : f32 to vector<25x128xf32>
    %31 = arith.select %29, %30, %17 : vector<25x128xi1>, vector<25x128xf32>
    %cst_11 = arith.constant dense<0xFF800000> : vector<25xf32>
    %32 = vector.multi_reduction <maximumf>, %31, %cst_11 [1] : vector<25x128xf32> to vector<25xf32>
    %33 = vector.shape_cast %32 : vector<25xf32> to vector<25x1xf32>
    %34 = vector.broadcast %33 : vector<25x1xf32> to vector<25x128xf32>
    %35 = arith.cmpf oeq, %31, %34 : vector<25x128xf32>
    %c1073741824_i32_12 = arith.constant 1073741824 : i32
    %36 = vector.broadcast %c1073741824_i32_12 : i32 to vector<25x128xi32>
    %37 = arith.select %35, %10, %36 : vector<25x128xi1>, vector<25x128xi32>
    %cst_13 = arith.constant dense<2147483647> : vector<25xi32>
    %38 = vector.multi_reduction <minsi>, %37, %cst_13 [1] : vector<25x128xi32> to vector<25xi32>
    %39 = vector.shape_cast %38 : vector<25xi32> to vector<25x1xi32>
    %40 = arith.addf %27, %33 : vector<25x1xf32>
    %41 = vector.broadcast %39 : vector<25x1xi32> to vector<25x128xi32>
    %42 = arith.cmpi eq, %10, %41 : vector<25x128xi32>
    %cst_14 = arith.constant 0xFF800000 : f32
    %43 = vector.broadcast %cst_14 : f32 to vector<25x128xf32>
    %44 = arith.select %42, %43, %31 : vector<25x128xi1>, vector<25x128xf32>
    %cst_15 = arith.constant dense<0xFF800000> : vector<25xf32>
    %45 = vector.multi_reduction <maximumf>, %44, %cst_15 [1] : vector<25x128xf32> to vector<25xf32>
    %46 = vector.shape_cast %45 : vector<25xf32> to vector<25x1xf32>
    %47 = arith.addf %40, %46 : vector<25x1xf32>
    %48 = vector.shape_cast %47 : vector<25x1xf32> to vector<1x25x1xf32>
    %cst_16 = arith.constant dense<0.000000e+00> : vector<1xf32>
    %49 = vector.multi_reduction <add>, %48, %cst_16 [1, 2] : vector<1x25x1xf32> to vector<1xf32>
    %50 = vector.shape_cast %49 : vector<1xf32> to vector<1x1x1xf32>
    %51 = vector.extract %50[0, 0, 0] : f32 from vector<1x1x1xf32>
    %52 = vector.broadcast %51 : f32 to vector<1x1xf32>
    %c0_i32 = arith.constant 0 : i32
    %53 = vector.broadcast %c0_i32 : i32 to vector<1x5xi32>
    %54 = arith.cmpi eq, %13, %53 : vector<1x5xi32>
    %55 = vector.shape_cast %52 : vector<1x1xf32> to vector<1x1xf32>
    %56 = vector.broadcast %55 : vector<1x1xf32> to vector<1x5xf32>
    %57 = arith.select %54, %56, %14 : vector<1x5xi1>, vector<1x5xf32>
    %58 = vector.extract_strided_slice %9 {offsets = [0, 128], sizes = [25, 128], strides = [1, 1]} : vector<25x640xf32> to vector<25x128xf32>
    %cst_17 = arith.constant 0xFF800000 : f32
    %59 = vector.broadcast %cst_17 : f32 to vector<25x128xf32>
    %60 = arith.select %12, %58, %59 : vector<25x128xi1>, vector<25x128xf32>
    %cst_18 = arith.constant 0.000000e+00 : f32
    %61 = vector.broadcast %cst_18 : f32 to vector<25x1xf32>
    %cst_19 = arith.constant dense<0xFF800000> : vector<25xf32>
    %62 = vector.multi_reduction <maximumf>, %60, %cst_19 [1] : vector<25x128xf32> to vector<25xf32>
    %63 = vector.shape_cast %62 : vector<25xf32> to vector<25x1xf32>
    %64 = vector.broadcast %63 : vector<25x1xf32> to vector<25x128xf32>
    %65 = arith.cmpf oeq, %60, %64 : vector<25x128xf32>
    %c1073741824_i32_20 = arith.constant 1073741824 : i32
    %66 = vector.broadcast %c1073741824_i32_20 : i32 to vector<25x128xi32>
    %67 = arith.select %65, %10, %66 : vector<25x128xi1>, vector<25x128xi32>
    %cst_21 = arith.constant dense<2147483647> : vector<25xi32>
    %68 = vector.multi_reduction <minsi>, %67, %cst_21 [1] : vector<25x128xi32> to vector<25xi32>
    %69 = vector.shape_cast %68 : vector<25xi32> to vector<25x1xi32>
    %70 = arith.addf %61, %63 : vector<25x1xf32>
    %71 = vector.broadcast %69 : vector<25x1xi32> to vector<25x128xi32>
    %72 = arith.cmpi eq, %10, %71 : vector<25x128xi32>
    %cst_22 = arith.constant 0xFF800000 : f32
    %73 = vector.broadcast %cst_22 : f32 to vector<25x128xf32>
    %74 = arith.select %72, %73, %60 : vector<25x128xi1>, vector<25x128xf32>
    %cst_23 = arith.constant dense<0xFF800000> : vector<25xf32>
    %75 = vector.multi_reduction <maximumf>, %74, %cst_23 [1] : vector<25x128xf32> to vector<25xf32>
    %76 = vector.shape_cast %75 : vector<25xf32> to vector<25x1xf32>
    %77 = vector.broadcast %76 : vector<25x1xf32> to vector<25x128xf32>
    %78 = arith.cmpf oeq, %74, %77 : vector<25x128xf32>
    %c1073741824_i32_24 = arith.constant 1073741824 : i32
    %79 = vector.broadcast %c1073741824_i32_24 : i32 to vector<25x128xi32>
    %80 = arith.select %78, %10, %79 : vector<25x128xi1>, vector<25x128xi32>
    %cst_25 = arith.constant dense<2147483647> : vector<25xi32>
    %81 = vector.multi_reduction <minsi>, %80, %cst_25 [1] : vector<25x128xi32> to vector<25xi32>
    %82 = vector.shape_cast %81 : vector<25xi32> to vector<25x1xi32>
    %83 = arith.addf %70, %76 : vector<25x1xf32>
    %84 = vector.broadcast %82 : vector<25x1xi32> to vector<25x128xi32>
    %85 = arith.cmpi eq, %10, %84 : vector<25x128xi32>
    %cst_26 = arith.constant 0xFF800000 : f32
    %86 = vector.broadcast %cst_26 : f32 to vector<25x128xf32>
    %87 = arith.select %85, %86, %74 : vector<25x128xi1>, vector<25x128xf32>
    %cst_27 = arith.constant dense<0xFF800000> : vector<25xf32>
    %88 = vector.multi_reduction <maximumf>, %87, %cst_27 [1] : vector<25x128xf32> to vector<25xf32>
    %89 = vector.shape_cast %88 : vector<25xf32> to vector<25x1xf32>
    %90 = arith.addf %83, %89 : vector<25x1xf32>
    %91 = vector.shape_cast %90 : vector<25x1xf32> to vector<1x25x1xf32>
    %cst_28 = arith.constant dense<0.000000e+00> : vector<1xf32>
    %92 = vector.multi_reduction <add>, %91, %cst_28 [1, 2] : vector<1x25x1xf32> to vector<1xf32>
    %93 = vector.shape_cast %92 : vector<1xf32> to vector<1x1x1xf32>
    %94 = vector.extract %93[0, 0, 0] : f32 from vector<1x1x1xf32>
    %95 = vector.broadcast %94 : f32 to vector<1x1xf32>
    %c1_i32 = arith.constant 1 : i32
    %96 = vector.broadcast %c1_i32 : i32 to vector<1x5xi32>
    %97 = arith.cmpi eq, %13, %96 : vector<1x5xi32>
    %98 = vector.shape_cast %95 : vector<1x1xf32> to vector<1x1xf32>
    %99 = vector.broadcast %98 : vector<1x1xf32> to vector<1x5xf32>
    %100 = arith.select %97, %99, %57 : vector<1x5xi1>, vector<1x5xf32>
    %101 = vector.extract_strided_slice %9 {offsets = [0, 256], sizes = [25, 128], strides = [1, 1]} : vector<25x640xf32> to vector<25x128xf32>
    %cst_29 = arith.constant 0xFF800000 : f32
    %102 = vector.broadcast %cst_29 : f32 to vector<25x128xf32>
    %103 = arith.select %12, %101, %102 : vector<25x128xi1>, vector<25x128xf32>
    %cst_30 = arith.constant 0.000000e+00 : f32
    %104 = vector.broadcast %cst_30 : f32 to vector<25x1xf32>
    %cst_31 = arith.constant dense<0xFF800000> : vector<25xf32>
    %105 = vector.multi_reduction <maximumf>, %103, %cst_31 [1] : vector<25x128xf32> to vector<25xf32>
    %106 = vector.shape_cast %105 : vector<25xf32> to vector<25x1xf32>
    %107 = vector.broadcast %106 : vector<25x1xf32> to vector<25x128xf32>
    %108 = arith.cmpf oeq, %103, %107 : vector<25x128xf32>
    %c1073741824_i32_32 = arith.constant 1073741824 : i32
    %109 = vector.broadcast %c1073741824_i32_32 : i32 to vector<25x128xi32>
    %110 = arith.select %108, %10, %109 : vector<25x128xi1>, vector<25x128xi32>
    %cst_33 = arith.constant dense<2147483647> : vector<25xi32>
    %111 = vector.multi_reduction <minsi>, %110, %cst_33 [1] : vector<25x128xi32> to vector<25xi32>
    %112 = vector.shape_cast %111 : vector<25xi32> to vector<25x1xi32>
    %113 = arith.addf %104, %106 : vector<25x1xf32>
    %114 = vector.broadcast %112 : vector<25x1xi32> to vector<25x128xi32>
    %115 = arith.cmpi eq, %10, %114 : vector<25x128xi32>
    %cst_34 = arith.constant 0xFF800000 : f32
    %116 = vector.broadcast %cst_34 : f32 to vector<25x128xf32>
    %117 = arith.select %115, %116, %103 : vector<25x128xi1>, vector<25x128xf32>
    %cst_35 = arith.constant dense<0xFF800000> : vector<25xf32>
    %118 = vector.multi_reduction <maximumf>, %117, %cst_35 [1] : vector<25x128xf32> to vector<25xf32>
    %119 = vector.shape_cast %118 : vector<25xf32> to vector<25x1xf32>
    %120 = vector.broadcast %119 : vector<25x1xf32> to vector<25x128xf32>
    %121 = arith.cmpf oeq, %117, %120 : vector<25x128xf32>
    %c1073741824_i32_36 = arith.constant 1073741824 : i32
    %122 = vector.broadcast %c1073741824_i32_36 : i32 to vector<25x128xi32>
    %123 = arith.select %121, %10, %122 : vector<25x128xi1>, vector<25x128xi32>
    %cst_37 = arith.constant dense<2147483647> : vector<25xi32>
    %124 = vector.multi_reduction <minsi>, %123, %cst_37 [1] : vector<25x128xi32> to vector<25xi32>
    %125 = vector.shape_cast %124 : vector<25xi32> to vector<25x1xi32>
    %126 = arith.addf %113, %119 : vector<25x1xf32>
    %127 = vector.broadcast %125 : vector<25x1xi32> to vector<25x128xi32>
    %128 = arith.cmpi eq, %10, %127 : vector<25x128xi32>
    %cst_38 = arith.constant 0xFF800000 : f32
    %129 = vector.broadcast %cst_38 : f32 to vector<25x128xf32>
    %130 = arith.select %128, %129, %117 : vector<25x128xi1>, vector<25x128xf32>
    %cst_39 = arith.constant dense<0xFF800000> : vector<25xf32>
    %131 = vector.multi_reduction <maximumf>, %130, %cst_39 [1] : vector<25x128xf32> to vector<25xf32>
    %132 = vector.shape_cast %131 : vector<25xf32> to vector<25x1xf32>
    %133 = arith.addf %126, %132 : vector<25x1xf32>
    %134 = vector.shape_cast %133 : vector<25x1xf32> to vector<1x25x1xf32>
    %cst_40 = arith.constant dense<0.000000e+00> : vector<1xf32>
    %135 = vector.multi_reduction <add>, %134, %cst_40 [1, 2] : vector<1x25x1xf32> to vector<1xf32>
    %136 = vector.shape_cast %135 : vector<1xf32> to vector<1x1x1xf32>
    %137 = vector.extract %136[0, 0, 0] : f32 from vector<1x1x1xf32>
    %138 = vector.broadcast %137 : f32 to vector<1x1xf32>
    %c2_i32 = arith.constant 2 : i32
    %139 = vector.broadcast %c2_i32 : i32 to vector<1x5xi32>
    %140 = arith.cmpi eq, %13, %139 : vector<1x5xi32>
    %141 = vector.shape_cast %138 : vector<1x1xf32> to vector<1x1xf32>
    %142 = vector.broadcast %141 : vector<1x1xf32> to vector<1x5xf32>
    %143 = arith.select %140, %142, %100 : vector<1x5xi1>, vector<1x5xf32>
    %144 = vector.extract_strided_slice %9 {offsets = [0, 384], sizes = [25, 128], strides = [1, 1]} : vector<25x640xf32> to vector<25x128xf32>
    %cst_41 = arith.constant 0xFF800000 : f32
    %145 = vector.broadcast %cst_41 : f32 to vector<25x128xf32>
    %146 = arith.select %12, %144, %145 : vector<25x128xi1>, vector<25x128xf32>
    %cst_42 = arith.constant 0.000000e+00 : f32
    %147 = vector.broadcast %cst_42 : f32 to vector<25x1xf32>
    %cst_43 = arith.constant dense<0xFF800000> : vector<25xf32>
    %148 = vector.multi_reduction <maximumf>, %146, %cst_43 [1] : vector<25x128xf32> to vector<25xf32>
    %149 = vector.shape_cast %148 : vector<25xf32> to vector<25x1xf32>
    %150 = vector.broadcast %149 : vector<25x1xf32> to vector<25x128xf32>
    %151 = arith.cmpf oeq, %146, %150 : vector<25x128xf32>
    %c1073741824_i32_44 = arith.constant 1073741824 : i32
    %152 = vector.broadcast %c1073741824_i32_44 : i32 to vector<25x128xi32>
    %153 = arith.select %151, %10, %152 : vector<25x128xi1>, vector<25x128xi32>
    %cst_45 = arith.constant dense<2147483647> : vector<25xi32>
    %154 = vector.multi_reduction <minsi>, %153, %cst_45 [1] : vector<25x128xi32> to vector<25xi32>
    %155 = vector.shape_cast %154 : vector<25xi32> to vector<25x1xi32>
    %156 = arith.addf %147, %149 : vector<25x1xf32>
    %157 = vector.broadcast %155 : vector<25x1xi32> to vector<25x128xi32>
    %158 = arith.cmpi eq, %10, %157 : vector<25x128xi32>
    %cst_46 = arith.constant 0xFF800000 : f32
    %159 = vector.broadcast %cst_46 : f32 to vector<25x128xf32>
    %160 = arith.select %158, %159, %146 : vector<25x128xi1>, vector<25x128xf32>
    %cst_47 = arith.constant dense<0xFF800000> : vector<25xf32>
    %161 = vector.multi_reduction <maximumf>, %160, %cst_47 [1] : vector<25x128xf32> to vector<25xf32>
    %162 = vector.shape_cast %161 : vector<25xf32> to vector<25x1xf32>
    %163 = vector.broadcast %162 : vector<25x1xf32> to vector<25x128xf32>
    %164 = arith.cmpf oeq, %160, %163 : vector<25x128xf32>
    %c1073741824_i32_48 = arith.constant 1073741824 : i32
    %165 = vector.broadcast %c1073741824_i32_48 : i32 to vector<25x128xi32>
    %166 = arith.select %164, %10, %165 : vector<25x128xi1>, vector<25x128xi32>
    %cst_49 = arith.constant dense<2147483647> : vector<25xi32>
    %167 = vector.multi_reduction <minsi>, %166, %cst_49 [1] : vector<25x128xi32> to vector<25xi32>
    %168 = vector.shape_cast %167 : vector<25xi32> to vector<25x1xi32>
    %169 = arith.addf %156, %162 : vector<25x1xf32>
    %170 = vector.broadcast %168 : vector<25x1xi32> to vector<25x128xi32>
    %171 = arith.cmpi eq, %10, %170 : vector<25x128xi32>
    %cst_50 = arith.constant 0xFF800000 : f32
    %172 = vector.broadcast %cst_50 : f32 to vector<25x128xf32>
    %173 = arith.select %171, %172, %160 : vector<25x128xi1>, vector<25x128xf32>
    %cst_51 = arith.constant dense<0xFF800000> : vector<25xf32>
    %174 = vector.multi_reduction <maximumf>, %173, %cst_51 [1] : vector<25x128xf32> to vector<25xf32>
    %175 = vector.shape_cast %174 : vector<25xf32> to vector<25x1xf32>
    %176 = arith.addf %169, %175 : vector<25x1xf32>
    %177 = vector.shape_cast %176 : vector<25x1xf32> to vector<1x25x1xf32>
    %cst_52 = arith.constant dense<0.000000e+00> : vector<1xf32>
    %178 = vector.multi_reduction <add>, %177, %cst_52 [1, 2] : vector<1x25x1xf32> to vector<1xf32>
    %179 = vector.shape_cast %178 : vector<1xf32> to vector<1x1x1xf32>
    %180 = vector.extract %179[0, 0, 0] : f32 from vector<1x1x1xf32>
    %181 = vector.broadcast %180 : f32 to vector<1x1xf32>
    %c3_i32 = arith.constant 3 : i32
    %182 = vector.broadcast %c3_i32 : i32 to vector<1x5xi32>
    %183 = arith.cmpi eq, %13, %182 : vector<1x5xi32>
    %184 = vector.shape_cast %181 : vector<1x1xf32> to vector<1x1xf32>
    %185 = vector.broadcast %184 : vector<1x1xf32> to vector<1x5xf32>
    %186 = arith.select %183, %185, %143 : vector<1x5xi1>, vector<1x5xf32>
    %187 = vector.extract_strided_slice %9 {offsets = [0, 512], sizes = [25, 128], strides = [1, 1]} : vector<25x640xf32> to vector<25x128xf32>
    %cst_53 = arith.constant 0xFF800000 : f32
    %188 = vector.broadcast %cst_53 : f32 to vector<25x128xf32>
    %189 = arith.select %12, %187, %188 : vector<25x128xi1>, vector<25x128xf32>
    %cst_54 = arith.constant 0.000000e+00 : f32
    %190 = vector.broadcast %cst_54 : f32 to vector<25x1xf32>
    %cst_55 = arith.constant dense<0xFF800000> : vector<25xf32>
    %191 = vector.multi_reduction <maximumf>, %189, %cst_55 [1] : vector<25x128xf32> to vector<25xf32>
    %192 = vector.shape_cast %191 : vector<25xf32> to vector<25x1xf32>
    %193 = vector.broadcast %192 : vector<25x1xf32> to vector<25x128xf32>
    %194 = arith.cmpf oeq, %189, %193 : vector<25x128xf32>
    %c1073741824_i32_56 = arith.constant 1073741824 : i32
    %195 = vector.broadcast %c1073741824_i32_56 : i32 to vector<25x128xi32>
    %196 = arith.select %194, %10, %195 : vector<25x128xi1>, vector<25x128xi32>
    %cst_57 = arith.constant dense<2147483647> : vector<25xi32>
    %197 = vector.multi_reduction <minsi>, %196, %cst_57 [1] : vector<25x128xi32> to vector<25xi32>
    %198 = vector.shape_cast %197 : vector<25xi32> to vector<25x1xi32>
    %199 = arith.addf %190, %192 : vector<25x1xf32>
    %200 = vector.broadcast %198 : vector<25x1xi32> to vector<25x128xi32>
    %201 = arith.cmpi eq, %10, %200 : vector<25x128xi32>
    %cst_58 = arith.constant 0xFF800000 : f32
    %202 = vector.broadcast %cst_58 : f32 to vector<25x128xf32>
    %203 = arith.select %201, %202, %189 : vector<25x128xi1>, vector<25x128xf32>
    %cst_59 = arith.constant dense<0xFF800000> : vector<25xf32>
    %204 = vector.multi_reduction <maximumf>, %203, %cst_59 [1] : vector<25x128xf32> to vector<25xf32>
    %205 = vector.shape_cast %204 : vector<25xf32> to vector<25x1xf32>
    %206 = vector.broadcast %205 : vector<25x1xf32> to vector<25x128xf32>
    %207 = arith.cmpf oeq, %203, %206 : vector<25x128xf32>
    %c1073741824_i32_60 = arith.constant 1073741824 : i32
    %208 = vector.broadcast %c1073741824_i32_60 : i32 to vector<25x128xi32>
    %209 = arith.select %207, %10, %208 : vector<25x128xi1>, vector<25x128xi32>
    %cst_61 = arith.constant dense<2147483647> : vector<25xi32>
    %210 = vector.multi_reduction <minsi>, %209, %cst_61 [1] : vector<25x128xi32> to vector<25xi32>
    %211 = vector.shape_cast %210 : vector<25xi32> to vector<25x1xi32>
    %212 = arith.addf %199, %205 : vector<25x1xf32>
    %213 = vector.broadcast %211 : vector<25x1xi32> to vector<25x128xi32>
    %214 = arith.cmpi eq, %10, %213 : vector<25x128xi32>
    %cst_62 = arith.constant 0xFF800000 : f32
    %215 = vector.broadcast %cst_62 : f32 to vector<25x128xf32>
    %216 = arith.select %214, %215, %203 : vector<25x128xi1>, vector<25x128xf32>
    %cst_63 = arith.constant dense<0xFF800000> : vector<25xf32>
    %217 = vector.multi_reduction <maximumf>, %216, %cst_63 [1] : vector<25x128xf32> to vector<25xf32>
    %218 = vector.shape_cast %217 : vector<25xf32> to vector<25x1xf32>
    %219 = arith.addf %212, %218 : vector<25x1xf32>
    %220 = vector.shape_cast %219 : vector<25x1xf32> to vector<1x25x1xf32>
    %cst_64 = arith.constant dense<0.000000e+00> : vector<1xf32>
    %221 = vector.multi_reduction <add>, %220, %cst_64 [1, 2] : vector<1x25x1xf32> to vector<1xf32>
    %222 = vector.shape_cast %221 : vector<1xf32> to vector<1x1x1xf32>
    %223 = vector.extract %222[0, 0, 0] : f32 from vector<1x1x1xf32>
    %224 = vector.broadcast %223 : f32 to vector<1x1xf32>
    %c4_i32 = arith.constant 4 : i32
    %225 = vector.broadcast %c4_i32 : i32 to vector<1x5xi32>
    %226 = arith.cmpi eq, %13, %225 : vector<1x5xi32>
    %227 = vector.shape_cast %224 : vector<1x1xf32> to vector<1x1xf32>
    %228 = vector.broadcast %227 : vector<1x1xf32> to vector<1x5xf32>
    %229 = arith.select %226, %228, %186 : vector<1x5xi1>, vector<1x5xf32>
    %c0_65 = arith.constant 0 : index
    %c0_66 = arith.constant 0 : index
    %c0_67 = arith.constant 0 : index
    %230 = vector.load %arg3[%c0_65, %c0_66, %c0_67] : memref<1x1x5xf32, #tpu.memory_space<vmem>>, vector<1x1x5xf32>
    %231 = vector.shape_cast %230 : vector<1x1x5xf32> to vector<1x5xf32>
    %232 = vector.shape_cast %229 : vector<1x5xf32> to vector<1x1x5xf32>
    tpu.vector_store %arg3[%c0_65, %c0_66, %c0_67], %232 {strides = array<i32>} : memref<1x1x5xf32, #tpu.memory_space<vmem>>, vector<1x1x5xf32>,
    return
  }
  func.func @transform_0(%arg0: i32) -> (i32, i32, i32) {
    %c0_i32 = arith.constant 0 : i32
    %c0_i32_0 = arith.constant 0 : i32
    %c0_i32_1 = arith.constant 0 : i32
    return %arg0, %c0_i32, %c0_i32_0 : i32, i32, i32
  }
  func.func @transform_1(%arg0: i32) -> (i32, i32) {
    %c0_i32 = arith.constant 0 : i32
    %c0_i32_0 = arith.constant 0 : i32
    %c0_i32_1 = arith.constant 0 : i32
    return %c0_i32, %c0_i32_0 : i32, i32
  }
  func.func @transform_2(%arg0: i32) -> (i32, i32, i32) {
    %c0_i32 = arith.constant 0 : i32
    %c0_i32_0 = arith.constant 0 : i32
    %c0_i32_1 = arith.constant 0 : i32
    return %arg0, %c0_i32, %c0_i32_0 : i32, i32, i32
  }
}

</mosaic_0001>

<llo_original>
// kernel: tpu_custom_call.1
$region0: #{tpu_custom_call.1}
  #allocation0 [shape = 'u32[]', space=smem, size = 0x4, offset = 0x4, fixed_abs, tag = 'smem constant byte address 0x4 - core index']
  #allocation1 [shape = 'u32[144,128]{1,0:T(1,128)}', space=vmem, size = 0x12000, scoped, tag = 'internal scratch']
  %s0 = inlined_call_operand.vmem [shape: f32[2,25,64], index: 0, kind: input, shape index: {}]
  %s1 = inlined_call_operand.hbm [shape: f32[64,640], index: 1, kind: input, shape index: {}]
  %s2 = inlined_call_operand.hbm [shape: f32[2,1,5], index: 2, kind: output, shape index: {}]
  %s3 = sld [smem:[#allocation0]]
  $region45: #{tpu_custom_call.1} parent=0
    _
  %s5 = ssub.s32 1, %s3
  %s6 = scalar_select 0, %s5, %s3
  $region1: #{tpu_custom_call.1} parent=0
    #allocation2 [shape = 'u8[163840]{0}', space=vmem, size = 0x28000, scoped, tag = 'input window, operand 1, single buffered']
    #allocation3 [shape = 's32[2]{0}', space=sflag, size = 0x8, scoped, tag = 'scoped memory for tpu_custom_call.1']
    #allocation4 [shape = 's32[2]{0}', space=sflag, size = 0x8, scoped, tag = 'scoped memory for tpu_custom_call.1']
    #allocation5 [shape = 'u8[1024]{0}', space=vmem, size = 0x400, scoped, tag = 'output window, operand 0']
    %7 = vsyncpa [#allocation3], 0
    %8 = vsyncpa [#allocation4], 0
    %s9 = scalar_lea.sflag [#allocation4], 1
    %10 = vsyncpa %s9, 0
    loop: start=0, step=1, limit=4
    $region2: #{tpu_custom_call.1} parent=1 // loop_pre_header
      _
    $region3: #{tpu_custom_call.1} parent=1 // loop_header
      %s12 = sphi 0, %s16
      %p13 = scmp.ge.s32.totalorder %s12, 4
      %s22 = sphi 0, %s24
      %s25 = sphi 0, %s22
      %s26 = sphi 0, %s25
      %s42 = sphi 0, %s26
      %s46 = sphi 0, %s46
      %s48 = sphi 0, %s46
      %s49 = sphi 0, %s48
      %s63 = sphi 0, %s49
      %s69 = sphi 0, %s71
      %s72 = sphi 0, %s69
      %s73 = sphi 0, %s72
      %s89 = sphi 0, %s73
    $region4: #{tpu_custom_call.1} parent=1 // loop_header_branch
      %15 = sbr.rel (%p13) target = $region8
    $region5: #{tpu_custom_call.1} parent=1 // loop_body
      %s17 = ssub.s32 %s12, 1
      %s18 = ssub.s32 %s12, 2
      %s19 = sadd.s32 %s12, 1
      %s20 = ssub.s32 %s12, %s19
      %p21 = scmp.eq.s32.totalorder %s20, 0
      %s23 = sadd.s32 %s22, 1
      %s24 = scalar_select %p21, %s22, %s23
      %p27 = pneg %p21
      %p28 = scmp.eq.s32.totalorder %s12, 1
      %p29 = por %p27, %p28
      %p30 = scmp.ne.s32.totalorder %s22, %s25
      %p31 = scmp.eq.s32.totalorder %s12, 0
      %p32 = por %p30, %p31
      %p33 = scmp.ne.s32.totalorder %s22, %s25
      %p34 = scmp.eq.s32.totalorder %s17, 1
      %p35 = por %p33, %p34
      %p36 = scmp.ne.s32.totalorder %s25, %s26
      %p37 = scmp.eq.s32.totalorder %s17, 0
      %p38 = por %p36, %p37
      %p39 = scmp.ne.s32.totalorder %s25, %s26
      %p40 = scmp.eq.s32.totalorder %s18, 1
      %p41 = por %p39, %p40
      %p43 = scmp.ne.s32.totalorder %s26, %s42
      %p44 = scmp.eq.s32.totalorder %s18, 0
      %p45 = por %p43, %p44
      %s47 = sadd.s32 %s46, 1
      %p50 = scmp.eq.s32.totalorder %s12, 1
      %p51 = scmp.ne.s32.totalorder %s46, %s48
      %p52 = scmp.eq.s32.totalorder %s12, 0
      %p53 = por %p51, %p52
      %p54 = scmp.ne.s32.totalorder %s46, %s48
      %p55 = scmp.eq.s32.totalorder %s17, 1
      %p56 = por %p54, %p55
      %p57 = scmp.ne.s32.totalorder %s48, %s49
      %p58 = scmp.eq.s32.totalorder %s17, 0
      %p59 = por %p57, %p58
      %p60 = scmp.ne.s32.totalorder %s48, %s49
      %p61 = scmp.eq.s32.totalorder %s18, 1
      %p62 = por %p60, %p61
      %p64 = scmp.ne.s32.totalorder %s49, %s63
      %p65 = scmp.eq.s32.totalorder %s18, 0
      %p66 = por %p64, %p65
      %s67 = ssub.s32 %s12, %s19
      %p68 = scmp.eq.s32.totalorder %s67, 0
      %s70 = sadd.s32 %s69, 1
      %s71 = scalar_select %p68, %s69, %s70
      %p74 = pneg %p68
      %p75 = scmp.eq.s32.totalorder %s12, 1
      %p76 = por %p74, %p75
      %p77 = scmp.ne.s32.totalorder %s69, %s72
      %p78 = scmp.eq.s32.totalorder %s12, 0
      %p79 = por %p77, %p78
      %p80 = scmp.ne.s32.totalorder %s69, %s72
      %p81 = scmp.eq.s32.totalorder %s17, 1
      %p82 = por %p80, %p81
      %p83 = scmp.ne.s32.totalorder %s72, %s73
      %p84 = scmp.eq.s32.totalorder %s17, 0
      %p85 = por %p83, %p84
      %p86 = scmp.ne.s32.totalorder %s72, %s73
      %p87 = scmp.eq.s32.totalorder %s18, 1
      %p88 = por %p86, %p87
      %p90 = scmp.ne.s32.totalorder %s73, %s89
      %p91 = scmp.eq.s32.totalorder %s18, 0
      %p92 = por %p90, %p91
      %p93 = scmp.le.s32.totalorder 1, %s12
      %p94 = scmp.lt.s32.totalorder %s12, 3
      %p95 = pnand %p93, %p94
      %p96 = pneg %p95
      // Predicated region
      $region9: #{tpu_custom_call.1} parent=5 // pred_check
        _
      $region10: #{tpu_custom_call.1} parent=5 // pred_check_branch
        %98 = sbr.rel (%p95) target = $region12
      $region11: #{tpu_custom_call.1} parent=5 // pred_region
        %s99 = ssub.s32 %s12, 1
        // Predicated region
        $region13: #{tpu_custom_call.1} parent=11 // pred_check
          %p100 = pneg %p59
        $region14: #{tpu_custom_call.1} parent=11 // pred_check_branch
          %102 = sbr.rel (%p100) target = $region16
        $region15: #{tpu_custom_call.1} parent=11 // pred_region
          %s104 = ssub.s32 5120, 5120
          %105 = vsyncadd [#allocation3], %s104
          %s106 = sshll.u32 [#allocation2], 4
          %s107 = int_to_ptr.vmem [resolvable:$true] %s106
          %112 = dma.hbm_to_vmem [thread:$0]  %s1, 5120, %s107, [#allocation3], 640, 640, 40
        $region16: #{tpu_custom_call.1} parent=11 // pred_fallthru
          _
      $region12: #{tpu_custom_call.1} parent=5 // pred_fallthru
        _
      %p113 = scmp.lt.s32.totalorder %s12, 2
      // Predicated region
      $region17: #{tpu_custom_call.1} parent=5 // pred_check
        %p114 = pneg %p113
      $region18: #{tpu_custom_call.1} parent=5 // pred_check_branch
        %116 = sbr.rel (%p114) target = $region20
      $region19: #{tpu_custom_call.1} parent=5 // pred_region
        // Predicated region
        $region21: #{tpu_custom_call.1} parent=19 // pred_check
          %p117 = pneg %p32
        $region22: #{tpu_custom_call.1} parent=19 // pred_check_branch
          %119 = sbr.rel (%p117) target = $region24
        $region23: #{tpu_custom_call.1} parent=19 // pred_region
          %p120 = scmp.lt.s32.totalorder %s12, 1
          %s121 = scalar_select %p120, %s12, 1
          %s122 = smul.addr %s121, 4
          %s123 = smul.addr %s122, 8
          %s124 = scalar_lea.vmem %s0, %s123
        $region24: #{tpu_custom_call.1} parent=19 // pred_fallthru
          _
      $region20: #{tpu_custom_call.1} parent=5 // pred_fallthru
        _
      %p125 = scmp.le.s32.totalorder 1, %s12
      %p126 = scmp.lt.s32.totalorder %s12, 3
      %p127 = pnand %p125, %p126
      %p128 = pneg %p127
      // Predicated region
      $region25: #{tpu_custom_call.1} parent=5 // pred_check
        _
      $region26: #{tpu_custom_call.1} parent=5 // pred_check_branch
        %130 = sbr.rel (%p127) target = $region28
      $region27: #{tpu_custom_call.1} parent=5 // pred_region
        %s131 = ssub.s32 %s12, 1
        // Predicated region
        $region29: #{tpu_custom_call.1} parent=27 // pred_check
          %p132 = pneg %p59
        $region30: #{tpu_custom_call.1} parent=27 // pred_check_branch
          %134 = sbr.rel (%p132) target = $region32
        $region31: #{tpu_custom_call.1} parent=27 // pred_region
          %135 = dma.done [#allocation3], 5120
        $region32: #{tpu_custom_call.1} parent=27 // pred_fallthru
          _
        %p136 = scmp.lt.s32.totalorder %s17, 1
        %s137 = scalar_select %p136, %s17, 1
        %s138 = smul.addr %s137, 4
        %s139 = smul.addr %s138, 8
        %s140 = scalar_lea.vmem %s0, %s139
        %p141 = pneg %p38
        %p142 = pneg %p35
        %p143 = pneg %p59
        %p144 = pneg %p56
        %p145 = pneg %p85
        %p146 = pneg %p82
        %s147 = sand.u32 %s72, 1
        %s148 = scalar_lea.sflag [#allocation4], %s147
        %s149 = sand.u32 %s72, 1
        %s150 = scalar_lea.vmem [#allocation5], %s149
        %p151 = scmp.lt.s32.totalorder %s17, 1
        %s152 = scalar_select %p151, %s17, 1
        %s153 = smul.addr %s152, 4
        %s154 = smul.addr %s153, 8
        %s155 = scalar_lea.vmem %s0, %s154
        %v156 = vld [vmem:[%s155] sm:$0xff]
        %v157 = vld [vmem:[%s155 + $0x8] sm:$0xff]
        %v158 = vld [vmem:[%s155 + $0x10] sm:$0xff]
        %v159 = vld [vmem:[%s155 + $0x18] sm:$0x1]
        %v160 = vmul.f32 %v156, %v156
        %v161 = vmul.f32 %v157, %v157
        %v162 = vmul.f32 %v158, %v158
        %v163 = vmul.f32 %v159, %v159
        %vm164 = vcmask 523264
        %v165 = vsel %vm164, %v160, 0.0
        %166 = vadd.xlane.f32.xlu0 %v165
        %v167 = vpop.xlane.xlu0 %166
        %v168 = vsel %vm164, %v161, 0.0
        %169 = vadd.xlane.f32.xlu0 %v168
        %v170 = vpop.xlane.xlu0 %169
        %v171 = vsel %vm164, %v162, 0.0
        %172 = vadd.xlane.f32.xlu0 %v171
        %v173 = vpop.xlane.xlu0 %172
        %vm174 = vcmask 516096
        %v175 = vsel %vm174, %v163, 0.0
        %176 = vadd.xlane.f32.xlu0 %v175
        %v177 = vpop.xlane.xlu0 %176
        %v178 = vrsqrt.pop %v167
        %v179 = vrsqrt.pop %v170
        %v180 = vrsqrt.pop %v173
        %v181 = vrsqrt.pop %v177
        %v182 = vmul.f32 %v156, %v178
        %v183 = vmul.f32 %v157, %v179
        %v184 = vmul.f32 %v158, %v180
        %v185 = vmul.f32 %v159, %v181
        %v186 = vld [vmem:[#allocation2] sm:$0xff]
        %v187 = vld [vmem:[#allocation2 + $0x8] sm:$0xff]
        %v188 = vld [vmem:[#allocation2 + $0x10] sm:$0xff]
        %v189 = vld [vmem:[#allocation2 + $0x18] sm:$0xff]
        %v190 = vld [vmem:[#allocation2 + $0x20] sm:$0xff]
        %v191 = vld [vmem:[#allocation2 + $0x28] sm:$0xff]
        %v192 = vld [vmem:[#allocation2 + $0x30] sm:$0xff]
        %v193 = vld [vmem:[#allocation2 + $0x38] sm:$0xff]
        %v194 = vld [vmem:[#allocation2 + $0x40] sm:$0xff]
        %v195 = vld [vmem:[#allocation2 + $0x48] sm:$0xff]
        %v196 = vld [vmem:[#allocation2 + $0x50] sm:$0xff]
        %v197 = vld [vmem:[#allocation2 + $0x58] sm:$0xff]
        %v198 = vld [vmem:[#allocation2 + $0x60] sm:$0xff]
        %v199 = vld [vmem:[#allocation2 + $0x68] sm:$0xff]
        %v200 = vld [vmem:[#allocation2 + $0x70] sm:$0xff]
        %v201 = vld [vmem:[#allocation2 + $0x78] sm:$0xff]
        %v202 = vld [vmem:[#allocation2 + $0x80] sm:$0xff]
        %v203 = vld [vmem:[#allocation2 + $0x88] sm:$0xff]
        %v204 = vld [vmem:[#allocation2 + $0x90] sm:$0xff]
        %v205 = vld [vmem:[#allocation2 + $0x98] sm:$0xff]
        %v206 = vld [vmem:[#allocation2 + $0xa0] sm:$0xff]
        %v207 = vld [vmem:[#allocation2 + $0xa8] sm:$0xff]
        %v208 = vld [vmem:[#allocation2 + $0xb0] sm:$0xff]
        %v209 = vld [vmem:[#allocation2 + $0xb8] sm:$0xff]
        %v210 = vld [vmem:[#allocation2 + $0xc0] sm:$0xff]
        %v211 = vld [vmem:[#allocation2 + $0xc8] sm:$0xff]
        %v212 = vld [vmem:[#allocation2 + $0xd0] sm:$0xff]
        %v213 = vld [vmem:[#allocation2 + $0xd8] sm:$0xff]
        %v214 = vld [vmem:[#allocation2 + $0xe0] sm:$0xff]
        %v215 = vld [vmem:[#allocation2 + $0xe8] sm:$0xff]
        %v216 = vld [vmem:[#allocation2 + $0xf0] sm:$0xff]
        %v217 = vld [vmem:[#allocation2 + $0xf8] sm:$0xff]
        %v218 = vld [vmem:[#allocation2 + $0x100] sm:$0xff]
        %v219 = vld [vmem:[#allocation2 + $0x108] sm:$0xff]
        %v220 = vld [vmem:[#allocation2 + $0x110] sm:$0xff]
        %v221 = vld [vmem:[#allocation2 + $0x118] sm:$0xff]
        %v222 = vld [vmem:[#allocation2 + $0x120] sm:$0xff]
        %v223 = vld [vmem:[#allocation2 + $0x128] sm:$0xff]
        %v224 = vld [vmem:[#allocation2 + $0x130] sm:$0xff]
        %v225 = vld [vmem:[#allocation2 + $0x138] sm:$0xff]
        %v227 = vsel %vm164, %v182, 0
        %v230 = vsel %vm164, %v183, 0
        %v233 = vsel %vm164, %v184, 0
        %v236 = vsel %vm164, %v185, 0
        %238 = vmatprep.subr.mxu0 %v187
        %239 = vmatpush1.msra.mxu0 %v186
        %240 = vmatprep.subr.mxu0 %v192
        %241 = vmatpush1.msra.mxu0 %v191
        %242 = vmatprep.subr.mxu0 %v197
        %243 = vmatpush1.msra.mxu0 %v196
        %244 = vmatprep.subr.mxu0 %v202
        %245 = vmatpush1.msra.mxu0 %v201
        %246 = vmatprep.subr.mxu0 %v207
        %247 = vmatpush1.msra.mxu0 %v206
        %248 = vmatprep.subr.mxu0 %v212
        %249 = vmatpush1.msra.mxu0 %v211
        %250 = vmatprep.subr.mxu0 %v217
        %251 = vmatpush1.msra.mxu0 %v216
        %252 = vmatprep.subr.mxu0 %v222
        %253 = vmatpush1.msra.mxu0 %v221
        %254 = vmatprep.subr.mxu0 0.0
        %255 = vmatpush1.msra.mxu0 0.0
        %256 = vmatprep.subr.mxu0 0.0
        %257 = vmatpush1.msra.mxu0 0.0
        %258 = vmatprep.subr.mxu0 0.0
        %259 = vmatpush1.msra.mxu0 0.0
        %260 = vmatprep.subr.mxu0 0.0
        %261 = vmatpush1.msra.mxu0 0.0
        %262 = vmatprep.subr.mxu0 0.0
        %263 = vmatpush1.msra.mxu0 0.0
        %264 = vmatprep.subr.mxu0 0.0
        %265 = vmatpush1.msra.mxu0 0.0
        %266 = vmatprep.subr.mxu0 0.0
        %267 = vmatpush1.msra.mxu0 0.0
        %268 = vmatprep.subr.mxu0 0.0
        %269 = vmatpush1.msra.mxu0 0.0
        %270 = vmatprep.subr.mxu0 0.0
        %271 = vmatpush1.msra.mxu0 0.0
        %272 = vmatprep.subr.mxu0 0.0
        %273 = vmatpush1.msra.mxu0 0.0
        %274 = vmatprep.subr.mxu0 0.0
        %275 = vmatpush1.msra.mxu0 0.0
        %276 = vmatprep.subr.mxu0 0.0
        %277 = vmatpush1.msra.mxu0 0.0
        %278 = vmatprep.subr.mxu0 0.0
        %279 = vmatpush1.msra.mxu0 0.0
        %280 = vmatprep.subr.mxu0 0.0
        %281 = vmatpush1.msra.mxu0 0.0
        %282 = vmatprep.subr.mxu0 0.0
        %283 = vmatpush1.msra.mxu0 0.0
        %284 = vmatprep.subr.mxu0 0.0
        %285 = vmatpush1.msra.mxu0 0.0
        %286 = vmatprep.subr.mxu0 0.0
        %287 = vmatpush1.msra.mxu0 0.0
        %288 = vmatprep.subr.mxu0 0.0
        %289 = vmatpush1.msra.mxu0 0.0
        %290 = vmatprep.subr.mxu0 0.0
        %291 = vmatpush1.msra.mxu0 0.0
        %292 = vmatprep.subr.mxu0 0.0
        %293 = vmatpush1.msra.mxu0 0.0
        %294 = vmatprep.subr.mxu0 0.0
        %295 = vmatpush1.msra.mxu0 0.0
        %296 = vmatprep.subr.mxu0 0.0
        %297 = vmatpush1.msra.mxu0 0.0
        %298 = vmatprep.subr.mxu0 0.0
        %299 = vmatpush1.msra.mxu0 0.0
        %300 = vmatprep.subr.mxu0 0.0
        %301 = vmatpush1.msra.mxu0 0.0
        %302 = vmatprep.mubr.f32.mxu0 0.0
        %303 = vmatmul.mubr.f32.gmra.mrb[0].mxu0 %v227
        %v304 = vpop.f32.mrb[0].mxu0
        %v305 = vadd.f32 0.0, %v304
        %v306 = vpop.f32.mrb[0].mxu0
        %v307 = vadd.f32 0.0, %v306
        %308 = vmatprep.mubr.f32.mxu0 0.0
        %309 = vmatmul.mubr.f32.gmra.mrb[0].mxu0 %v230
        %v310 = vpop.f32.mrb[0].mxu0
        %v311 = vadd.f32 0.0, %v310
        %v312 = vpop.f32.mrb[0].mxu0
        %v313 = vadd.f32 0.0, %v312
        %314 = vmatprep.mubr.f32.mxu0 0.0
        %315 = vmatmul.mubr.f32.gmra.mrb[0].mxu0 %v233
        %v316 = vpop.f32.mrb[0].mxu0
        %v317 = vadd.f32 0.0, %v316
        %v318 = vpop.f32.mrb[0].mxu0
        %v319 = vadd.f32 0.0, %v318
        %320 = vmatprep.mubr.f32.mxu0 0.0
        %321 = vmatmul.mubr.f32.gmra.mrb[0].mxu0 %v236
        %v322 = vpop.f32.mrb[0].mxu0
        %v323 = vadd.f32 0.0, %v322
        %v324 = vpop.f32.mrb[0].mxu0
        %v325 = vadd.f32 0.0, %v324
        %326 = vdwg.mxu0
        %327 = vmatprep.subr.mxu0 %v189
        %328 = vmatpush1.msra.mxu0 %v188
        %329 = vmatprep.subr.mxu0 %v194
        %330 = vmatpush1.msra.mxu0 %v193
        %331 = vmatprep.subr.mxu0 %v199
        %332 = vmatpush1.msra.mxu0 %v198
        %333 = vmatprep.subr.mxu0 %v204
        %334 = vmatpush1.msra.mxu0 %v203
        %335 = vmatprep.subr.mxu0 %v209
        %336 = vmatpush1.msra.mxu0 %v208
        %337 = vmatprep.subr.mxu0 %v214
        %338 = vmatpush1.msra.mxu0 %v213
        %339 = vmatprep.subr.mxu0 %v219
        %340 = vmatpush1.msra.mxu0 %v218
        %341 = vmatprep.subr.mxu0 %v224
        %342 = vmatpush1.msra.mxu0 %v223
        %343 = vmatprep.subr.mxu0 0.0
        %344 = vmatpush1.msra.mxu0 0.0
        %345 = vmatprep.subr.mxu0 0.0
        %346 = vmatpush1.msra.mxu0 0.0
        %347 = vmatprep.subr.mxu0 0.0
        %348 = vmatpush1.msra.mxu0 0.0
        %349 = vmatprep.subr.mxu0 0.0
        %350 = vmatpush1.msra.mxu0 0.0
        %351 = vmatprep.subr.mxu0 0.0
        %352 = vmatpush1.msra.mxu0 0.0
        %353 = vmatprep.subr.mxu0 0.0
        %354 = vmatpush1.msra.mxu0 0.0
        %355 = vmatprep.subr.mxu0 0.0
        %356 = vmatpush1.msra.mxu0 0.0
        %357 = vmatprep.subr.mxu0 0.0
        %358 = vmatpush1.msra.mxu0 0.0
        %359 = vmatprep.subr.mxu0 0.0
        %360 = vmatpush1.msra.mxu0 0.0
        %361 = vmatprep.subr.mxu0 0.0
        %362 = vmatpush1.msra.mxu0 0.0
        %363 = vmatprep.subr.mxu0 0.0
        %364 = vmatpush1.msra.mxu0 0.0
        %365 = vmatprep.subr.mxu0 0.0
        %366 = vmatpush1.msra.mxu0 0.0
        %367 = vmatprep.subr.mxu0 0.0
        %368 = vmatpush1.msra.mxu0 0.0
        %369 = vmatprep.subr.mxu0 0.0
        %370 = vmatpush1.msra.mxu0 0.0
        %371 = vmatprep.subr.mxu0 0.0
        %372 = vmatpush1.msra.mxu0 0.0
        %373 = vmatprep.subr.mxu0 0.0
        %374 = vmatpush1.msra.mxu0 0.0
        %375 = vmatprep.subr.mxu0 0.0
        %376 = vmatpush1.msra.mxu0 0.0
        %377 = vmatprep.subr.mxu0 0.0
        %378 = vmatpush1.msra.mxu0 0.0
        %379 = vmatprep.subr.mxu0 0.0
        %380 = vmatpush1.msra.mxu0 0.0
        %381 = vmatprep.subr.mxu0 0.0
        %382 = vmatpush1.msra.mxu0 0.0
        %383 = vmatprep.subr.mxu0 0.0
        %384 = vmatpush1.msra.mxu0 0.0
        %385 = vmatprep.subr.mxu0 0.0
        %386 = vmatpush1.msra.mxu0 0.0
        %387 = vmatprep.subr.mxu0 0.0
        %388 = vmatpush1.msra.mxu0 0.0
        %389 = vmatprep.subr.mxu0 0.0
        %390 = vmatpush1.msra.mxu0 0.0
        %391 = vmatprep.mubr.f32.mxu0 0.0
        %392 = vmatmul.mubr.f32.gmra.mrb[0].mxu0 %v227
        %v393 = vpop.f32.mrb[0].mxu0
        %v394 = vadd.f32 0.0, %v393
        %v395 = vpop.f32.mrb[0].mxu0
        %v396 = vadd.f32 0.0, %v395
        %397 = vmatprep.mubr.f32.mxu0 0.0
        %398 = vmatmul.mubr.f32.gmra.mrb[0].mxu0 %v230
        %v399 = vpop.f32.mrb[0].mxu0
        %v400 = vadd.f32 0.0, %v399
        %v401 = vpop.f32.mrb[0].mxu0
        %v402 = vadd.f32 0.0, %v401
        %403 = vmatprep.mubr.f32.mxu0 0.0
        %404 = vmatmul.mubr.f32.gmra.mrb[0].mxu0 %v233
        %v405 = vpop.f32.mrb[0].mxu0
        %v406 = vadd.f32 0.0, %v405
        %v407 = vpop.f32.mrb[0].mxu0
        %v408 = vadd.f32 0.0, %v407
        %409 = vmatprep.mubr.f32.mxu0 0.0
        %410 = vmatmul.mubr.f32.gmra.mrb[0].mxu0 %v236
        %v411 = vpop.f32.mrb[0].mxu0
        %v412 = vadd.f32 0.0, %v411
        %v413 = vpop.f32.mrb[0].mxu0
        %v414 = vadd.f32 0.0, %v413
        %415 = vdwg.mxu0
        %416 = vmatprep.subr.mxu0 0.0
        %417 = vmatpush1.msra.mxu0 %v190
        %418 = vmatprep.subr.mxu0 0.0
        %419 = vmatpush1.msra.mxu0 %v195
        %420 = vmatprep.subr.mxu0 0.0
        %421 = vmatpush1.msra.mxu0 %v200
        %422 = vmatprep.subr.mxu0 0.0
        %423 = vmatpush1.msra.mxu0 %v205
        %424 = vmatprep.subr.mxu0 0.0
        %425 = vmatpush1.msra.mxu0 %v210
        %426 = vmatprep.subr.mxu0 0.0
        %427 = vmatpush1.msra.mxu0 %v215
        %428 = vmatprep.subr.mxu0 0.0
        %429 = vmatpush1.msra.mxu0 %v220
        %430 = vmatprep.subr.mxu0 0.0
        %431 = vmatpush1.msra.mxu0 %v225
        %432 = vmatprep.subr.mxu0 0.0
        %433 = vmatpush1.msra.mxu0 0.0
        %434 = vmatprep.subr.mxu0 0.0
        %435 = vmatpush1.msra.mxu0 0.0
        %436 = vmatprep.subr.mxu0 0.0
        %437 = vmatpush1.msra.mxu0 0.0
        %438 = vmatprep.subr.mxu0 0.0
        %439 = vmatpush1.msra.mxu0 0.0
        %440 = vmatprep.subr.mxu0 0.0
        %441 = vmatpush1.msra.mxu0 0.0
        %442 = vmatprep.subr.mxu0 0.0
        %443 = vmatpush1.msra.mxu0 0.0
        %444 = vmatprep.subr.mxu0 0.0
        %445 = vmatpush1.msra.mxu0 0.0
        %446 = vmatprep.subr.mxu0 0.0
        %447 = vmatpush1.msra.mxu0 0.0
        %448 = vmatprep.subr.mxu0 0.0
        %449 = vmatpush1.msra.mxu0 0.0
        %450 = vmatprep.subr.mxu0 0.0
        %451 = vmatpush1.msra.mxu0 0.0
        %452 = vmatprep.subr.mxu0 0.0
        %453 = vmatpush1.msra.mxu0 0.0
        %454 = vmatprep.subr.mxu0 0.0
        %455 = vmatpush1.msra.mxu0 0.0
        %456 = vmatprep.subr.mxu0 0.0
        %457 = vmatpush1.msra.mxu0 0.0
        %458 = vmatprep.subr.mxu0 0.0
        %459 = vmatpush1.msra.mxu0 0.0
        %460 = vmatprep.subr.mxu0 0.0
        %461 = vmatpush1.msra.mxu0 0.0
        %462 = vmatprep.subr.mxu0 0.0
        %463 = vmatpush1.msra.mxu0 0.0
        %464 = vmatprep.subr.mxu0 0.0
        %465 = vmatpush1.msra.mxu0 0.0
        %466 = vmatprep.subr.mxu0 0.0
        %467 = vmatpush1.msra.mxu0 0.0
        %468 = vmatprep.subr.mxu0 0.0
        %469 = vmatpush1.msra.mxu0 0.0
        %470 = vmatprep.subr.mxu0 0.0
        %471 = vmatpush1.msra.mxu0 0.0
        %472 = vmatprep.subr.mxu0 0.0
        %473 = vmatpush1.msra.mxu0 0.0
        %474 = vmatprep.subr.mxu0 0.0
        %475 = vmatpush1.msra.mxu0 0.0
        %476 = vmatprep.subr.mxu0 0.0
        %477 = vmatpush1.msra.mxu0 0.0
        %478 = vmatprep.subr.mxu0 0.0
        %479 = vmatpush1.msra.mxu0 0.0
        %480 = vmatprep.mubr.f32.mxu0 0.0
        %481 = vmatmul.mubr.f32.gmra.mrb[0].mxu0 %v227
        %v482 = vpop.f32.mrb[0].mxu0
        %v483 = vadd.f32 0.0, %v482
        %v484 = vpop.f32.mrb[0].mxu0
        %485 = vmatprep.mubr.f32.mxu0 0.0
        %486 = vmatmul.mubr.f32.gmra.mrb[0].mxu0 %v230
        %v487 = vpop.f32.mrb[0].mxu0
        %v488 = vadd.f32 0.0, %v487
        %v489 = vpop.f32.mrb[0].mxu0
        %490 = vmatprep.mubr.f32.mxu0 0.0
        %491 = vmatmul.mubr.f32.gmra.mrb[0].mxu0 %v233
        %v492 = vpop.f32.mrb[0].mxu0
        %v493 = vadd.f32 0.0, %v492
        %v494 = vpop.f32.mrb[0].mxu0
        %495 = vmatprep.mubr.f32.mxu0 0.0
        %496 = vmatmul.mubr.f32.gmra.mrb[0].mxu0 %v236
        %v497 = vpop.f32.mrb[0].mxu0
        %v498 = vadd.f32 0.0, %v497
        %v499 = vpop.f32.mrb[0].mxu0
        %500 = vdwg.mxu0
        %v501 = vlaneseq
        %v502 = vand.u32 %v501, 127
        %vm503 = vcmp.lt.s32.totalorder %v502, 75
        %v504 = vsel %vm503, %v305, -inf
        %v505 = vsel %vm503, %v311, -inf
        %v506 = vsel %vm503, %v317, -inf
        %v507 = vsel %vm503, %v323, -inf
        %508 = vmax.xlane.f32.xlu0 %v504
        %v509 = vpop.xlane.xlu0 %508
        %510 = vmax.xlane.f32.xlu0 %v505
        %v511 = vpop.xlane.xlu0 %510
        %512 = vmax.xlane.f32.xlu0 %v506
        %v513 = vpop.xlane.xlu0 %512
        %vm514 = vcmask 1040384
        %v515 = vsel %vm514, %v507, -inf
        %516 = vmax.xlane.f32.xlu0 %v515
        %v517 = vpop.xlane.xlu0 %516
        %vm518 = vcmp.eq.f32.partialorder %v504, %v509
        %vm519 = vcmp.eq.f32.partialorder %v505, %v511
        %vm520 = vcmp.eq.f32.partialorder %v506, %v513
        %vm521 = vcmp.eq.f32.partialorder %v507, %v517
        %v522 = vsel %vm518, %v502, 1073741824
        %v523 = vsel %vm519, %v502, 1073741824
        %v524 = vsel %vm520, %v502, 1073741824
        %v525 = vsel %vm521, %v502, 1073741824
        %v526 = vand.u32 %v522, 65535
        %v527 = vshra.s32 %v522, 16
        %v528 = vcvt.s32.f32 %v526
        %v529 = vcvt.s32.f32 %v527
        %530 = vmin.xlane.f32.xlu0 %v529
        %v531 = vpop.xlane.xlu0 %530
        %vm532 = vcmp.eq.f32.partialorder %v529, %v531
        %v533 = vsel %vm532, %v528, inf
        %534 = vmin.xlane.f32.xlu0 %v533
        %v535 = vpop.xlane.xlu0 %534
        %v536 = vcvt.f32.s32 %v535
        %v537 = vcvt.f32.s32 %v531
        %v538 = vshll.u32 %v537, 16
        %v539 = vadd.s32 %v538, %v536
        %v540 = vand.u32 %v523, 65535
        %v541 = vshra.s32 %v523, 16
        %v542 = vcvt.s32.f32 %v540
        %v543 = vcvt.s32.f32 %v541
        %544 = vmin.xlane.f32.xlu0 %v543
        %v545 = vpop.xlane.xlu0 %544
        %vm546 = vcmp.eq.f32.partialorder %v543, %v545
        %v547 = vsel %vm546, %v542, inf
        %548 = vmin.xlane.f32.xlu0 %v547
        %v549 = vpop.xlane.xlu0 %548
        %v550 = vcvt.f32.s32 %v549
        %v551 = vcvt.f32.s32 %v545
        %v552 = vshll.u32 %v551, 16
        %v553 = vadd.s32 %v552, %v550
        %v554 = vand.u32 %v524, 65535
        %v555 = vshra.s32 %v524, 16
        %v556 = vcvt.s32.f32 %v554
        %v557 = vcvt.s32.f32 %v555
        %558 = vmin.xlane.f32.xlu0 %v557
        %v559 = vpop.xlane.xlu0 %558
        %vm560 = vcmp.eq.f32.partialorder %v557, %v559
        %v561 = vsel %vm560, %v556, inf
        %562 = vmin.xlane.f32.xlu0 %v561
        %v563 = vpop.xlane.xlu0 %562
        %v564 = vcvt.f32.s32 %v563
        %v565 = vcvt.f32.s32 %v559
        %v566 = vshll.u32 %v565, 16
        %v567 = vadd.s32 %v566, %v564
        %v568 = vsel %vm514, %v525, 2147483647
        %v569 = vand.u32 %v568, 65535
        %v570 = vshra.s32 %v568, 16
        %v571 = vcvt.s32.f32 %v569
        %v572 = vcvt.s32.f32 %v570
        %573 = vmin.xlane.f32.xlu0 %v572
        %v574 = vpop.xlane.xlu0 %573
        %vm575 = vcmp.eq.f32.partialorder %v572, %v574
        %v576 = vsel %vm575, %v571, inf
        %577 = vmin.xlane.f32.xlu0 %v576
        %v578 = vpop.xlane.xlu0 %577
        %v579 = vcvt.f32.s32 %v578
        %v580 = vcvt.f32.s32 %v574
        %v581 = vshll.u32 %v580, 16
        %v582 = vadd.s32 %v581, %v579
        %v583 = vadd.f32 %v509, 0.0
        %v584 = vadd.f32 %v511, 0.0
        %v585 = vadd.f32 %v513, 0.0
        %v586 = vadd.f32 %v517, 0.0
        %vm587 = vcmp.eq.s32.totalorder %v502, %v539
        %vm588 = vcmp.eq.s32.totalorder %v502, %v553
        %vm589 = vcmp.eq.s32.totalorder %v502, %v567
        %vm590 = vcmp.eq.s32.totalorder %v502, %v582
        %v591 = vsel %vm587, -inf, %v504
        %v592 = vsel %vm588, -inf, %v505
        %v593 = vsel %vm589, -inf, %v506
        %v594 = vsel %vm590, -inf, %v507
        %595 = vmax.xlane.f32.xlu0 %v591
        %v596 = vpop.xlane.xlu0 %595
        %597 = vmax.xlane.f32.xlu0 %v592
        %v598 = vpop.xlane.xlu0 %597
        %599 = vmax.xlane.f32.xlu0 %v593
        %v600 = vpop.xlane.xlu0 %599
        %v601 = vsel %vm514, %v594, -inf
        %602 = vmax.xlane.f32.xlu0 %v601
        %v603 = vpop.xlane.xlu0 %602
        %vm604 = vcmp.eq.f32.partialorder %v591, %v596
        %vm605 = vcmp.eq.f32.partialorder %v592, %v598
        %vm606 = vcmp.eq.f32.partialorder %v593, %v600
        %vm607 = vcmp.eq.f32.partialorder %v594, %v603
        %v608 = vsel %vm604, %v502, 1073741824
        %v609 = vsel %vm605, %v502, 1073741824
        %v610 = vsel %vm606, %v502, 1073741824
        %v611 = vsel %vm607, %v502, 1073741824
        %v612 = vand.u32 %v608, 65535
        %v613 = vshra.s32 %v608, 16
        %v614 = vcvt.s32.f32 %v612
        %v615 = vcvt.s32.f32 %v613
        %616 = vmin.xlane.f32.xlu0 %v615
        %v617 = vpop.xlane.xlu0 %616
        %vm618 = vcmp.eq.f32.partialorder %v615, %v617
        %v619 = vsel %vm618, %v614, inf
        %620 = vmin.xlane.f32.xlu0 %v619
        %v621 = vpop.xlane.xlu0 %620
        %v622 = vcvt.f32.s32 %v621
        %v623 = vcvt.f32.s32 %v617
        %v624 = vshll.u32 %v623, 16
        %v625 = vadd.s32 %v624, %v622
        %v626 = vand.u32 %v609, 65535
        %v627 = vshra.s32 %v609, 16
        %v628 = vcvt.s32.f32 %v626
        %v629 = vcvt.s32.f32 %v627
        %630 = vmin.xlane.f32.xlu0 %v629
        %v631 = vpop.xlane.xlu0 %630
        %vm632 = vcmp.eq.f32.partialorder %v629, %v631
        %v633 = vsel %vm632, %v628, inf
        %634 = vmin.xlane.f32.xlu0 %v633
        %v635 = vpop.xlane.xlu0 %634
        %v636 = vcvt.f32.s32 %v635
        %v637 = vcvt.f32.s32 %v631
        %v638 = vshll.u32 %v637, 16
        %v639 = vadd.s32 %v638, %v636
        %v640 = vand.u32 %v610, 65535
        %v641 = vshra.s32 %v610, 16
        %v642 = vcvt.s32.f32 %v640
        %v643 = vcvt.s32.f32 %v641
        %644 = vmin.xlane.f32.xlu0 %v643
        %v645 = vpop.xlane.xlu0 %644
        %vm646 = vcmp.eq.f32.partialorder %v643, %v645
        %v647 = vsel %vm646, %v642, inf
        %648 = vmin.xlane.f32.xlu0 %v647
        %v649 = vpop.xlane.xlu0 %648
        %v650 = vcvt.f32.s32 %v649
        %v651 = vcvt.f32.s32 %v645
        %v652 = vshll.u32 %v651, 16
        %v653 = vadd.s32 %v652, %v650
        %v654 = vsel %vm514, %v611, 2147483647
        %v655 = vand.u32 %v654, 65535
        %v656 = vshra.s32 %v654, 16
        %v657 = vcvt.s32.f32 %v655
        %v658 = vcvt.s32.f32 %v656
        %659 = vmin.xlane.f32.xlu0 %v658
        %v660 = vpop.xlane.xlu0 %659
        %vm661 = vcmp.eq.f32.partialorder %v658, %v660
        %v662 = vsel %vm661, %v657, inf
        %663 = vmin.xlane.f32.xlu0 %v662
        %v664 = vpop.xlane.xlu0 %663
        %v665 = vcvt.f32.s32 %v664
        %v666 = vcvt.f32.s32 %v660
        %v667 = vshll.u32 %v666, 16
        %v668 = vadd.s32 %v667, %v665
        %v669 = vadd.f32 %v583, %v596
        %v670 = vadd.f32 %v584, %v598
        %v671 = vadd.f32 %v585, %v600
        %v672 = vadd.f32 %v586, %v603
        %vm673 = vcmp.eq.s32.totalorder %v502, %v625
        %vm674 = vcmp.eq.s32.totalorder %v502, %v639
        %vm675 = vcmp.eq.s32.totalorder %v502, %v653
        %vm676 = vcmp.eq.s32.totalorder %v502, %v668
        %v677 = vsel %vm673, -inf, %v591
        %v678 = vsel %vm674, -inf, %v592
        %v679 = vsel %vm675, -inf, %v593
        %v680 = vsel %vm676, -inf, %v594
        %681 = vmax.xlane.f32.xlu0 %v677
        %v682 = vpop.xlane.xlu0 %681
        %683 = vmax.xlane.f32.xlu0 %v678
        %v684 = vpop.xlane.xlu0 %683
        %685 = vmax.xlane.f32.xlu0 %v679
        %v686 = vpop.xlane.xlu0 %685
        %v687 = vsel %vm514, %v680, -inf
        %688 = vmax.xlane.f32.xlu0 %v687
        %v689 = vpop.xlane.xlu0 %688
        %v690 = vadd.f32 %v669, %v682
        %v691 = vadd.f32 %v670, %v684
        %v692 = vadd.f32 %v671, %v686
        %v693 = vadd.f32 %v672, %v689
        %vm694 = vcmask 7168
        %v695 = vsel %vm694, %v690, 0.0
        %v696 = vsel %vm694, %v691, 0.0
        %v697 = vadd.f32 %v695, %v696
        %v698 = vsel %vm694, %v692, 0.0
        %v699 = vadd.f32 %v697, %v698
        %vm700 = vcmask 0
        %v701 = vsel %vm700, %v693, 0.0
        %v702 = vadd.f32 %v699, %v701
        %703 = vadd.xlane.f32.xlu0 %v702
        %v704 = vpop.xlane.xlu0 %703
        %v705 = vrot.slane %v704, 4
        %v706 = vadd.f32 %v704, %v705
        %v707 = vrot.slane %v706, 2
        %v708 = vadd.f32 %v706, %v707
        %v709 = vrot.slane %v708, 1
        %v710 = vadd.f32 %v708, %v709
        %s711 = vtos %v710
        %vm712 = vcmp.eq.s32.totalorder %v502, 0
        %v713 = vstv %s711
        %v714 = vsel %vm712, %v713, 0.0
        %v715 = vsel %vm503, %v307, -inf
        %v716 = vsel %vm503, %v313, -inf
        %v717 = vsel %vm503, %v319, -inf
        %v718 = vsel %vm503, %v325, -inf
        %719 = vmax.xlane.f32.xlu0 %v715
        %v720 = vpop.xlane.xlu0 %719
        %721 = vmax.xlane.f32.xlu0 %v716
        %v722 = vpop.xlane.xlu0 %721
        %723 = vmax.xlane.f32.xlu0 %v717
        %v724 = vpop.xlane.xlu0 %723
        %v725 = vsel %vm514, %v718, -inf
        %726 = vmax.xlane.f32.xlu0 %v725
        %v727 = vpop.xlane.xlu0 %726
        %vm728 = vcmp.eq.f32.partialorder %v715, %v720
        %vm729 = vcmp.eq.f32.partialorder %v716, %v722
        %vm730 = vcmp.eq.f32.partialorder %v717, %v724
        %vm731 = vcmp.eq.f32.partialorder %v718, %v727
        %v732 = vsel %vm728, %v502, 1073741824
        %v733 = vsel %vm729, %v502, 1073741824
        %v734 = vsel %vm730, %v502, 1073741824
        %v735 = vsel %vm731, %v502, 1073741824
        %v736 = vand.u32 %v732, 65535
        %v737 = vshra.s32 %v732, 16
        %v738 = vcvt.s32.f32 %v736
        %v739 = vcvt.s32.f32 %v737
        %740 = vmin.xlane.f32.xlu0 %v739
        %v741 = vpop.xlane.xlu0 %740
        %vm742 = vcmp.eq.f32.partialorder %v739, %v741
        %v743 = vsel %vm742, %v738, inf
        %744 = vmin.xlane.f32.xlu0 %v743
        %v745 = vpop.xlane.xlu0 %744
        %v746 = vcvt.f32.s32 %v745
        %v747 = vcvt.f32.s32 %v741
        %v748 = vshll.u32 %v747, 16
        %v749 = vadd.s32 %v748, %v746
        %v750 = vand.u32 %v733, 65535
        %v751 = vshra.s32 %v733, 16
        %v752 = vcvt.s32.f32 %v750
        %v753 = vcvt.s32.f32 %v751
        %754 = vmin.xlane.f32.xlu0 %v753
        %v755 = vpop.xlane.xlu0 %754
        %vm756 = vcmp.eq.f32.partialorder %v753, %v755
        %v757 = vsel %vm756, %v752, inf
        %758 = vmin.xlane.f32.xlu0 %v757
        %v759 = vpop.xlane.xlu0 %758
        %v760 = vcvt.f32.s32 %v759
        %v761 = vcvt.f32.s32 %v755
        %v762 = vshll.u32 %v761, 16
        %v763 = vadd.s32 %v762, %v760
        %v764 = vand.u32 %v734, 65535
        %v765 = vshra.s32 %v734, 16
        %v766 = vcvt.s32.f32 %v764
        %v767 = vcvt.s32.f32 %v765
        %768 = vmin.xlane.f32.xlu0 %v767
        %v769 = vpop.xlane.xlu0 %768
        %vm770 = vcmp.eq.f32.partialorder %v767, %v769
        %v771 = vsel %vm770, %v766, inf
        %772 = vmin.xlane.f32.xlu0 %v771
        %v773 = vpop.xlane.xlu0 %772
        %v774 = vcvt.f32.s32 %v773
        %v775 = vcvt.f32.s32 %v769
        %v776 = vshll.u32 %v775, 16
        %v777 = vadd.s32 %v776, %v774
        %v778 = vsel %vm514, %v735, 2147483647
        %v779 = vand.u32 %v778, 65535
        %v780 = vshra.s32 %v778, 16
        %v781 = vcvt.s32.f32 %v779
        %v782 = vcvt.s32.f32 %v780
        %783 = vmin.xlane.f32.xlu0 %v782
        %v784 = vpop.xlane.xlu0 %783
        %vm785 = vcmp.eq.f32.partialorder %v782, %v784
        %v786 = vsel %vm785, %v781, inf
        %787 = vmin.xlane.f32.xlu0 %v786
        %v788 = vpop.xlane.xlu0 %787
        %v789 = vcvt.f32.s32 %v788
        %v790 = vcvt.f32.s32 %v784
        %v791 = vshll.u32 %v790, 16
        %v792 = vadd.s32 %v791, %v789
        %v793 = vadd.f32 %v720, 0.0
        %v794 = vadd.f32 %v722, 0.0
        %v795 = vadd.f32 %v724, 0.0
        %v796 = vadd.f32 %v727, 0.0
        %vm797 = vcmp.eq.s32.totalorder %v502, %v749
        %vm798 = vcmp.eq.s32.totalorder %v502, %v763
        %vm799 = vcmp.eq.s32.totalorder %v502, %v777
        %vm800 = vcmp.eq.s32.totalorder %v502, %v792
        %v801 = vsel %vm797, -inf, %v715
        %v802 = vsel %vm798, -inf, %v716
        %v803 = vsel %vm799, -inf, %v717
        %v804 = vsel %vm800, -inf, %v718
        %805 = vmax.xlane.f32.xlu0 %v801
        %v806 = vpop.xlane.xlu0 %805
        %807 = vmax.xlane.f32.xlu0 %v802
        %v808 = vpop.xlane.xlu0 %807
        %809 = vmax.xlane.f32.xlu0 %v803
        %v810 = vpop.xlane.xlu0 %809
        %v811 = vsel %vm514, %v804, -inf
        %812 = vmax.xlane.f32.xlu0 %v811
        %v813 = vpop.xlane.xlu0 %812
        %vm814 = vcmp.eq.f32.partialorder %v801, %v806
        %vm815 = vcmp.eq.f32.partialorder %v802, %v808
        %vm816 = vcmp.eq.f32.partialorder %v803, %v810
        %vm817 = vcmp.eq.f32.partialorder %v804, %v813
        %v818 = vsel %vm814, %v502, 1073741824
        %v819 = vsel %vm815, %v502, 1073741824
        %v820 = vsel %vm816, %v502, 1073741824
        %v821 = vsel %vm817, %v502, 1073741824
        %v822 = vand.u32 %v818, 65535
        %v823 = vshra.s32 %v818, 16
        %v824 = vcvt.s32.f32 %v822
        %v825 = vcvt.s32.f32 %v823
        %826 = vmin.xlane.f32.xlu0 %v825
        %v827 = vpop.xlane.xlu0 %826
        %vm828 = vcmp.eq.f32.partialorder %v825, %v827
        %v829 = vsel %vm828, %v824, inf
        %830 = vmin.xlane.f32.xlu0 %v829
        %v831 = vpop.xlane.xlu0 %830
        %v832 = vcvt.f32.s32 %v831
        %v833 = vcvt.f32.s32 %v827
        %v834 = vshll.u32 %v833, 16
        %v835 = vadd.s32 %v834, %v832
        %v836 = vand.u32 %v819, 65535
        %v837 = vshra.s32 %v819, 16
        %v838 = vcvt.s32.f32 %v836
        %v839 = vcvt.s32.f32 %v837
        %840 = vmin.xlane.f32.xlu0 %v839
        %v841 = vpop.xlane.xlu0 %840
        %vm842 = vcmp.eq.f32.partialorder %v839, %v841
        %v843 = vsel %vm842, %v838, inf
        %844 = vmin.xlane.f32.xlu0 %v843
        %v845 = vpop.xlane.xlu0 %844
        %v846 = vcvt.f32.s32 %v845
        %v847 = vcvt.f32.s32 %v841
        %v848 = vshll.u32 %v847, 16
        %v849 = vadd.s32 %v848, %v846
        %v850 = vand.u32 %v820, 65535
        %v851 = vshra.s32 %v820, 16
        %v852 = vcvt.s32.f32 %v850
        %v853 = vcvt.s32.f32 %v851
        %854 = vmin.xlane.f32.xlu0 %v853
        %v855 = vpop.xlane.xlu0 %854
        %vm856 = vcmp.eq.f32.partialorder %v853, %v855
        %v857 = vsel %vm856, %v852, inf
        %858 = vmin.xlane.f32.xlu0 %v857
        %v859 = vpop.xlane.xlu0 %858
        %v860 = vcvt.f32.s32 %v859
        %v861 = vcvt.f32.s32 %v855
        %v862 = vshll.u32 %v861, 16
        %v863 = vadd.s32 %v862, %v860
        %v864 = vsel %vm514, %v821, 2147483647
        %v865 = vand.u32 %v864, 65535
        %v866 = vshra.s32 %v864, 16
        %v867 = vcvt.s32.f32 %v865
        %v868 = vcvt.s32.f32 %v866
        %869 = vmin.xlane.f32.xlu0 %v868
        %v870 = vpop.xlane.xlu0 %869
        %vm871 = vcmp.eq.f32.partialorder %v868, %v870
        %v872 = vsel %vm871, %v867, inf
        %873 = vmin.xlane.f32.xlu0 %v872
        %v874 = vpop.xlane.xlu0 %873
        %v875 = vcvt.f32.s32 %v874
        %v876 = vcvt.f32.s32 %v870
        %v877 = vshll.u32 %v876, 16
        %v878 = vadd.s32 %v877, %v875
        %v879 = vadd.f32 %v793, %v806
        %v880 = vadd.f32 %v794, %v808
        %v881 = vadd.f32 %v795, %v810
        %v882 = vadd.f32 %v796, %v813
        %vm883 = vcmp.eq.s32.totalorder %v502, %v835
        %vm884 = vcmp.eq.s32.totalorder %v502, %v849
        %vm885 = vcmp.eq.s32.totalorder %v502, %v863
        %vm886 = vcmp.eq.s32.totalorder %v502, %v878
        %v887 = vsel %vm883, -inf, %v801
        %v888 = vsel %vm884, -inf, %v802
        %v889 = vsel %vm885, -inf, %v803
        %v890 = vsel %vm886, -inf, %v804
        %891 = vmax.xlane.f32.xlu0 %v887
        %v892 = vpop.xlane.xlu0 %891
        %893 = vmax.xlane.f32.xlu0 %v888
        %v894 = vpop.xlane.xlu0 %893
        %895 = vmax.xlane.f32.xlu0 %v889
        %v896 = vpop.xlane.xlu0 %895
        %v897 = vsel %vm514, %v890, -inf
        %898 = vmax.xlane.f32.xlu0 %v897
        %v899 = vpop.xlane.xlu0 %898
        %v900 = vadd.f32 %v879, %v892
        %v901 = vadd.f32 %v880, %v894
        %v902 = vadd.f32 %v881, %v896
        %v903 = vadd.f32 %v882, %v899
        %v904 = vsel %vm694, %v900, 0.0
        %v905 = vsel %vm694, %v901, 0.0
        %v906 = vadd.f32 %v904, %v905
        %v907 = vsel %vm694, %v902, 0.0
        %v908 = vadd.f32 %v906, %v907
        %v909 = vsel %vm700, %v903, 0.0
        %v910 = vadd.f32 %v908, %v909
        %911 = vadd.xlane.f32.xlu0 %v910
        %v912 = vpop.xlane.xlu0 %911
        %v913 = vrot.slane %v912, 4
        %v914 = vadd.f32 %v912, %v913
        %v915 = vrot.slane %v914, 2
        %v916 = vadd.f32 %v914, %v915
        %v917 = vrot.slane %v916, 1
        %v918 = vadd.f32 %v916, %v917
        %s919 = vtos %v918
        %vm920 = vcmp.eq.s32.totalorder %v502, 1
        %v921 = vstv %s919
        %v922 = vsel %vm920, %v921, %v714
        %v923 = vsel %vm503, %v394, -inf
        %v924 = vsel %vm503, %v400, -inf
        %v925 = vsel %vm503, %v406, -inf
        %v926 = vsel %vm503, %v412, -inf
        %927 = vmax.xlane.f32.xlu0 %v923
        %v928 = vpop.xlane.xlu0 %927
        %929 = vmax.xlane.f32.xlu0 %v924
        %v930 = vpop.xlane.xlu0 %929
        %931 = vmax.xlane.f32.xlu0 %v925
        %v932 = vpop.xlane.xlu0 %931
        %v933 = vsel %vm514, %v926, -inf
        %934 = vmax.xlane.f32.xlu0 %v933
        %v935 = vpop.xlane.xlu0 %934
        %vm936 = vcmp.eq.f32.partialorder %v923, %v928
        %vm937 = vcmp.eq.f32.partialorder %v924, %v930
        %vm938 = vcmp.eq.f32.partialorder %v925, %v932
        %vm939 = vcmp.eq.f32.partialorder %v926, %v935
        %v940 = vsel %vm936, %v502, 1073741824
        %v941 = vsel %vm937, %v502, 1073741824
        %v942 = vsel %vm938, %v502, 1073741824
        %v943 = vsel %vm939, %v502, 1073741824
        %v944 = vand.u32 %v940, 65535
        %v945 = vshra.s32 %v940, 16
        %v946 = vcvt.s32.f32 %v944
        %v947 = vcvt.s32.f32 %v945
        %948 = vmin.xlane.f32.xlu0 %v947
        %v949 = vpop.xlane.xlu0 %948
        %vm950 = vcmp.eq.f32.partialorder %v947, %v949
        %v951 = vsel %vm950, %v946, inf
        %952 = vmin.xlane.f32.xlu0 %v951
        %v953 = vpop.xlane.xlu0 %952
        %v954 = vcvt.f32.s32 %v953
        %v955 = vcvt.f32.s32 %v949
        %v956 = vshll.u32 %v955, 16
        %v957 = vadd.s32 %v956, %v954
        %v958 = vand.u32 %v941, 65535
        %v959 = vshra.s32 %v941, 16
        %v960 = vcvt.s32.f32 %v958
        %v961 = vcvt.s32.f32 %v959
        %962 = vmin.xlane.f32.xlu0 %v961
        %v963 = vpop.xlane.xlu0 %962
        %vm964 = vcmp.eq.f32.partialorder %v961, %v963
        %v965 = vsel %vm964, %v960, inf
        %966 = vmin.xlane.f32.xlu0 %v965
        %v967 = vpop.xlane.xlu0 %966
        %v968 = vcvt.f32.s32 %v967
        %v969 = vcvt.f32.s32 %v963
        %v970 = vshll.u32 %v969, 16
        %v971 = vadd.s32 %v970, %v968
        %v972 = vand.u32 %v942, 65535
        %v973 = vshra.s32 %v942, 16
        %v974 = vcvt.s32.f32 %v972
        %v975 = vcvt.s32.f32 %v973
        %976 = vmin.xlane.f32.xlu0 %v975
        %v977 = vpop.xlane.xlu0 %976
        %vm978 = vcmp.eq.f32.partialorder %v975, %v977
        %v979 = vsel %vm978, %v974, inf
        %980 = vmin.xlane.f32.xlu0 %v979
        %v981 = vpop.xlane.xlu0 %980
        %v982 = vcvt.f32.s32 %v981
        %v983 = vcvt.f32.s32 %v977
        %v984 = vshll.u32 %v983, 16
        %v985 = vadd.s32 %v984, %v982
        %v986 = vsel %vm514, %v943, 2147483647
        %v987 = vand.u32 %v986, 65535
        %v988 = vshra.s32 %v986, 16
        %v989 = vcvt.s32.f32 %v987
        %v990 = vcvt.s32.f32 %v988
        %991 = vmin.xlane.f32.xlu0 %v990
        %v992 = vpop.xlane.xlu0 %991
        %vm993 = vcmp.eq.f32.partialorder %v990, %v992
        %v994 = vsel %vm993, %v989, inf
        %995 = vmin.xlane.f32.xlu0 %v994
        %v996 = vpop.xlane.xlu0 %995
        %v997 = vcvt.f32.s32 %v996
        %v998 = vcvt.f32.s32 %v992
        %v999 = vshll.u32 %v998, 16
        %v1000 = vadd.s32 %v999, %v997
        %v1001 = vadd.f32 %v928, 0.0
        %v1002 = vadd.f32 %v930, 0.0
        %v1003 = vadd.f32 %v932, 0.0
        %v1004 = vadd.f32 %v935, 0.0
        %vm1005 = vcmp.eq.s32.totalorder %v502, %v957
        %vm1006 = vcmp.eq.s32.totalorder %v502, %v971
        %vm1007 = vcmp.eq.s32.totalorder %v502, %v985
        %vm1008 = vcmp.eq.s32.totalorder %v502, %v1000
        %v1009 = vsel %vm1005, -inf, %v923
        %v1010 = vsel %vm1006, -inf, %v924
        %v1011 = vsel %vm1007, -inf, %v925
        %v1012 = vsel %vm1008, -inf, %v926
        %1013 = vmax.xlane.f32.xlu0 %v1009
        %v1014 = vpop.xlane.xlu0 %1013
        %1015 = vmax.xlane.f32.xlu0 %v1010
        %v1016 = vpop.xlane.xlu0 %1015
        %1017 = vmax.xlane.f32.xlu0 %v1011
        %v1018 = vpop.xlane.xlu0 %1017
        %v1019 = vsel %vm514, %v1012, -inf
        %1020 = vmax.xlane.f32.xlu0 %v1019
        %v1021 = vpop.xlane.xlu0 %1020
        %vm1022 = vcmp.eq.f32.partialorder %v1009, %v1014
        %vm1023 = vcmp.eq.f32.partialorder %v1010, %v1016
        %vm1024 = vcmp.eq.f32.partialorder %v1011, %v1018
        %vm1025 = vcmp.eq.f32.partialorder %v1012, %v1021
        %v1026 = vsel %vm1022, %v502, 1073741824
        %v1027 = vsel %vm1023, %v502, 1073741824
        %v1028 = vsel %vm1024, %v502, 1073741824
        %v1029 = vsel %vm1025, %v502, 1073741824
        %v1030 = vand.u32 %v1026, 65535
        %v1031 = vshra.s32 %v1026, 16
        %v1032 = vcvt.s32.f32 %v1030
        %v1033 = vcvt.s32.f32 %v1031
        %1034 = vmin.xlane.f32.xlu0 %v1033
        %v1035 = vpop.xlane.xlu0 %1034
        %vm1036 = vcmp.eq.f32.partialorder %v1033, %v1035
        %v1037 = vsel %vm1036, %v1032, inf
        %1038 = vmin.xlane.f32.xlu0 %v1037
        %v1039 = vpop.xlane.xlu0 %1038
        %v1040 = vcvt.f32.s32 %v1039
        %v1041 = vcvt.f32.s32 %v1035
        %v1042 = vshll.u32 %v1041, 16
        %v1043 = vadd.s32 %v1042, %v1040
        %v1044 = vand.u32 %v1027, 65535
        %v1045 = vshra.s32 %v1027, 16
        %v1046 = vcvt.s32.f32 %v1044
        %v1047 = vcvt.s32.f32 %v1045
        %1048 = vmin.xlane.f32.xlu0 %v1047
        %v1049 = vpop.xlane.xlu0 %1048
        %vm1050 = vcmp.eq.f32.partialorder %v1047, %v1049
        %v1051 = vsel %vm1050, %v1046, inf
        %1052 = vmin.xlane.f32.xlu0 %v1051
        %v1053 = vpop.xlane.xlu0 %1052
        %v1054 = vcvt.f32.s32 %v1053
        %v1055 = vcvt.f32.s32 %v1049
        %v1056 = vshll.u32 %v1055, 16
        %v1057 = vadd.s32 %v1056, %v1054
        %v1058 = vand.u32 %v1028, 65535
        %v1059 = vshra.s32 %v1028, 16
        %v1060 = vcvt.s32.f32 %v1058
        %v1061 = vcvt.s32.f32 %v1059
        %1062 = vmin.xlane.f32.xlu0 %v1061
        %v1063 = vpop.xlane.xlu0 %1062
        %vm1064 = vcmp.eq.f32.partialorder %v1061, %v1063
        %v1065 = vsel %vm1064, %v1060, inf
        %1066 = vmin.xlane.f32.xlu0 %v1065
        %v1067 = vpop.xlane.xlu0 %1066
        %v1068 = vcvt.f32.s32 %v1067
        %v1069 = vcvt.f32.s32 %v1063
        %v1070 = vshll.u32 %v1069, 16
        %v1071 = vadd.s32 %v1070, %v1068
        %v1072 = vsel %vm514, %v1029, 2147483647
        %v1073 = vand.u32 %v1072, 65535
        %v1074 = vshra.s32 %v1072, 16
        %v1075 = vcvt.s32.f32 %v1073
        %v1076 = vcvt.s32.f32 %v1074
        %1077 = vmin.xlane.f32.xlu0 %v1076
        %v1078 = vpop.xlane.xlu0 %1077
        %vm1079 = vcmp.eq.f32.partialorder %v1076, %v1078
        %v1080 = vsel %vm1079, %v1075, inf
        %1081 = vmin.xlane.f32.xlu0 %v1080
        %v1082 = vpop.xlane.xlu0 %1081
        %v1083 = vcvt.f32.s32 %v1082
        %v1084 = vcvt.f32.s32 %v1078
        %v1085 = vshll.u32 %v1084, 16
        %v1086 = vadd.s32 %v1085, %v1083
        %v1087 = vadd.f32 %v1001, %v1014
        %v1088 = vadd.f32 %v1002, %v1016
        %v1089 = vadd.f32 %v1003, %v1018
        %v1090 = vadd.f32 %v1004, %v1021
        %vm1091 = vcmp.eq.s32.totalorder %v502, %v1043
        %vm1092 = vcmp.eq.s32.totalorder %v502, %v1057
        %vm1093 = vcmp.eq.s32.totalorder %v502, %v1071
        %vm1094 = vcmp.eq.s32.totalorder %v502, %v1086
        %v1095 = vsel %vm1091, -inf, %v1009
        %v1096 = vsel %vm1092, -inf, %v1010
        %v1097 = vsel %vm1093, -inf, %v1011
        %v1098 = vsel %vm1094, -inf, %v1012
        %1099 = vmax.xlane.f32.xlu0 %v1095
        %v1100 = vpop.xlane.xlu0 %1099
        %1101 = vmax.xlane.f32.xlu0 %v1096
        %v1102 = vpop.xlane.xlu0 %1101
        %1103 = vmax.xlane.f32.xlu0 %v1097
        %v1104 = vpop.xlane.xlu0 %1103
        %v1105 = vsel %vm514, %v1098, -inf
        %1106 = vmax.xlane.f32.xlu0 %v1105
        %v1107 = vpop.xlane.xlu0 %1106
        %v1108 = vadd.f32 %v1087, %v1100
        %v1109 = vadd.f32 %v1088, %v1102
        %v1110 = vadd.f32 %v1089, %v1104
        %v1111 = vadd.f32 %v1090, %v1107
        %v1112 = vsel %vm694, %v1108, 0.0
        %v1113 = vsel %vm694, %v1109, 0.0
        %v1114 = vadd.f32 %v1112, %v1113
        %v1115 = vsel %vm694, %v1110, 0.0
        %v1116 = vadd.f32 %v1114, %v1115
        %v1117 = vsel %vm700, %v1111, 0.0
        %v1118 = vadd.f32 %v1116, %v1117
        %1119 = vadd.xlane.f32.xlu0 %v1118
        %v1120 = vpop.xlane.xlu0 %1119
        %v1121 = vrot.slane %v1120, 4
        %v1122 = vadd.f32 %v1120, %v1121
        %v1123 = vrot.slane %v1122, 2
        %v1124 = vadd.f32 %v1122, %v1123
        %v1125 = vrot.slane %v1124, 1
        %v1126 = vadd.f32 %v1124, %v1125
        %s1127 = vtos %v1126
        %vm1128 = vcmp.eq.s32.totalorder %v502, 2
        %v1129 = vstv %s1127
        %v1130 = vsel %vm1128, %v1129, %v922
        %v1131 = vsel %vm503, %v396, -inf
        %v1132 = vsel %vm503, %v402, -inf
        %v1133 = vsel %vm503, %v408, -inf
        %v1134 = vsel %vm503, %v414, -inf
        %1135 = vmax.xlane.f32.xlu0 %v1131
        %v1136 = vpop.xlane.xlu0 %1135
        %1137 = vmax.xlane.f32.xlu0 %v1132
        %v1138 = vpop.xlane.xlu0 %1137
        %1139 = vmax.xlane.f32.xlu0 %v1133
        %v1140 = vpop.xlane.xlu0 %1139
        %v1141 = vsel %vm514, %v1134, -inf
        %1142 = vmax.xlane.f32.xlu0 %v1141
        %v1143 = vpop.xlane.xlu0 %1142
        %vm1144 = vcmp.eq.f32.partialorder %v1131, %v1136
        %vm1145 = vcmp.eq.f32.partialorder %v1132, %v1138
        %vm1146 = vcmp.eq.f32.partialorder %v1133, %v1140
        %vm1147 = vcmp.eq.f32.partialorder %v1134, %v1143
        %v1148 = vsel %vm1144, %v502, 1073741824
        %v1149 = vsel %vm1145, %v502, 1073741824
        %v1150 = vsel %vm1146, %v502, 1073741824
        %v1151 = vsel %vm1147, %v502, 1073741824
        %v1152 = vand.u32 %v1148, 65535
        %v1153 = vshra.s32 %v1148, 16
        %v1154 = vcvt.s32.f32 %v1152
        %v1155 = vcvt.s32.f32 %v1153
        %1156 = vmin.xlane.f32.xlu0 %v1155
        %v1157 = vpop.xlane.xlu0 %1156
        %vm1158 = vcmp.eq.f32.partialorder %v1155, %v1157
        %v1159 = vsel %vm1158, %v1154, inf
        %1160 = vmin.xlane.f32.xlu0 %v1159
        %v1161 = vpop.xlane.xlu0 %1160
        %v1162 = vcvt.f32.s32 %v1161
        %v1163 = vcvt.f32.s32 %v1157
        %v1164 = vshll.u32 %v1163, 16
        %v1165 = vadd.s32 %v1164, %v1162
        %v1166 = vand.u32 %v1149, 65535
        %v1167 = vshra.s32 %v1149, 16
        %v1168 = vcvt.s32.f32 %v1166
        %v1169 = vcvt.s32.f32 %v1167
        %1170 = vmin.xlane.f32.xlu0 %v1169
        %v1171 = vpop.xlane.xlu0 %1170
        %vm1172 = vcmp.eq.f32.partialorder %v1169, %v1171
        %v1173 = vsel %vm1172, %v1168, inf
        %1174 = vmin.xlane.f32.xlu0 %v1173
        %v1175 = vpop.xlane.xlu0 %1174
        %v1176 = vcvt.f32.s32 %v1175
        %v1177 = vcvt.f32.s32 %v1171
        %v1178 = vshll.u32 %v1177, 16
        %v1179 = vadd.s32 %v1178, %v1176
        %v1180 = vand.u32 %v1150, 65535
        %v1181 = vshra.s32 %v1150, 16
        %v1182 = vcvt.s32.f32 %v1180
        %v1183 = vcvt.s32.f32 %v1181
        %1184 = vmin.xlane.f32.xlu0 %v1183
        %v1185 = vpop.xlane.xlu0 %1184
        %vm1186 = vcmp.eq.f32.partialorder %v1183, %v1185
        %v1187 = vsel %vm1186, %v1182, inf
        %1188 = vmin.xlane.f32.xlu0 %v1187
        %v1189 = vpop.xlane.xlu0 %1188
        %v1190 = vcvt.f32.s32 %v1189
        %v1191 = vcvt.f32.s32 %v1185
        %v1192 = vshll.u32 %v1191, 16
        %v1193 = vadd.s32 %v1192, %v1190
        %v1194 = vsel %vm514, %v1151, 2147483647
        %v1195 = vand.u32 %v1194, 65535
        %v1196 = vshra.s32 %v1194, 16
        %v1197 = vcvt.s32.f32 %v1195
        %v1198 = vcvt.s32.f32 %v1196
        %1199 = vmin.xlane.f32.xlu0 %v1198
        %v1200 = vpop.xlane.xlu0 %1199
        %vm1201 = vcmp.eq.f32.partialorder %v1198, %v1200
        %v1202 = vsel %vm1201, %v1197, inf
        %1203 = vmin.xlane.f32.xlu0 %v1202
        %v1204 = vpop.xlane.xlu0 %1203
        %v1205 = vcvt.f32.s32 %v1204
        %v1206 = vcvt.f32.s32 %v1200
        %v1207 = vshll.u32 %v1206, 16
        %v1208 = vadd.s32 %v1207, %v1205
        %v1209 = vadd.f32 %v1136, 0.0
        %v1210 = vadd.f32 %v1138, 0.0
        %v1211 = vadd.f32 %v1140, 0.0
        %v1212 = vadd.f32 %v1143, 0.0
        %vm1213 = vcmp.eq.s32.totalorder %v502, %v1165
        %vm1214 = vcmp.eq.s32.totalorder %v502, %v1179
        %vm1215 = vcmp.eq.s32.totalorder %v502, %v1193
        %vm1216 = vcmp.eq.s32.totalorder %v502, %v1208
        %v1217 = vsel %vm1213, -inf, %v1131
        %v1218 = vsel %vm1214, -inf, %v1132
        %v1219 = vsel %vm1215, -inf, %v1133
        %v1220 = vsel %vm1216, -inf, %v1134
        %1221 = vmax.xlane.f32.xlu0 %v1217
        %v1222 = vpop.xlane.xlu0 %1221
        %1223 = vmax.xlane.f32.xlu0 %v1218
        %v1224 = vpop.xlane.xlu0 %1223
        %1225 = vmax.xlane.f32.xlu0 %v1219
        %v1226 = vpop.xlane.xlu0 %1225
        %v1227 = vsel %vm514, %v1220, -inf
        %1228 = vmax.xlane.f32.xlu0 %v1227
        %v1229 = vpop.xlane.xlu0 %1228
        %vm1230 = vcmp.eq.f32.partialorder %v1217, %v1222
        %vm1231 = vcmp.eq.f32.partialorder %v1218, %v1224
        %vm1232 = vcmp.eq.f32.partialorder %v1219, %v1226
        %vm1233 = vcmp.eq.f32.partialorder %v1220, %v1229
        %v1234 = vsel %vm1230, %v502, 1073741824
        %v1235 = vsel %vm1231, %v502, 1073741824
        %v1236 = vsel %vm1232, %v502, 1073741824
        %v1237 = vsel %vm1233, %v502, 1073741824
        %v1238 = vand.u32 %v1234, 65535
        %v1239 = vshra.s32 %v1234, 16
        %v1240 = vcvt.s32.f32 %v1238
        %v1241 = vcvt.s32.f32 %v1239
        %1242 = vmin.xlane.f32.xlu0 %v1241
        %v1243 = vpop.xlane.xlu0 %1242
        %vm1244 = vcmp.eq.f32.partialorder %v1241, %v1243
        %v1245 = vsel %vm1244, %v1240, inf
        %1246 = vmin.xlane.f32.xlu0 %v1245
        %v1247 = vpop.xlane.xlu0 %1246
        %v1248 = vcvt.f32.s32 %v1247
        %v1249 = vcvt.f32.s32 %v1243
        %v1250 = vshll.u32 %v1249, 16
        %v1251 = vadd.s32 %v1250, %v1248
        %v1252 = vand.u32 %v1235, 65535
        %v1253 = vshra.s32 %v1235, 16
        %v1254 = vcvt.s32.f32 %v1252
        %v1255 = vcvt.s32.f32 %v1253
        %1256 = vmin.xlane.f32.xlu0 %v1255
        %v1257 = vpop.xlane.xlu0 %1256
        %vm1258 = vcmp.eq.f32.partialorder %v1255, %v1257
        %v1259 = vsel %vm1258, %v1254, inf
        %1260 = vmin.xlane.f32.xlu0 %v1259
        %v1261 = vpop.xlane.xlu0 %1260
        %v1262 = vcvt.f32.s32 %v1261
        %v1263 = vcvt.f32.s32 %v1257
        %v1264 = vshll.u32 %v1263, 16
        %v1265 = vadd.s32 %v1264, %v1262
        %v1266 = vand.u32 %v1236, 65535
        %v1267 = vshra.s32 %v1236, 16
        %v1268 = vcvt.s32.f32 %v1266
        %v1269 = vcvt.s32.f32 %v1267
        %1270 = vmin.xlane.f32.xlu0 %v1269
        %v1271 = vpop.xlane.xlu0 %1270
        %vm1272 = vcmp.eq.f32.partialorder %v1269, %v1271
        %v1273 = vsel %vm1272, %v1268, inf
        %1274 = vmin.xlane.f32.xlu0 %v1273
        %v1275 = vpop.xlane.xlu0 %1274
        %v1276 = vcvt.f32.s32 %v1275
        %v1277 = vcvt.f32.s32 %v1271
        %v1278 = vshll.u32 %v1277, 16
        %v1279 = vadd.s32 %v1278, %v1276
        %v1280 = vsel %vm514, %v1237, 2147483647
        %v1281 = vand.u32 %v1280, 65535
        %v1282 = vshra.s32 %v1280, 16
        %v1283 = vcvt.s32.f32 %v1281
        %v1284 = vcvt.s32.f32 %v1282
        %1285 = vmin.xlane.f32.xlu0 %v1284
        %v1286 = vpop.xlane.xlu0 %1285
        %vm1287 = vcmp.eq.f32.partialorder %v1284, %v1286
        %v1288 = vsel %vm1287, %v1283, inf
        %1289 = vmin.xlane.f32.xlu0 %v1288
        %v1290 = vpop.xlane.xlu0 %1289
        %v1291 = vcvt.f32.s32 %v1290
        %v1292 = vcvt.f32.s32 %v1286
        %v1293 = vshll.u32 %v1292, 16
        %v1294 = vadd.s32 %v1293, %v1291
        %v1295 = vadd.f32 %v1209, %v1222
        %v1296 = vadd.f32 %v1210, %v1224
        %v1297 = vadd.f32 %v1211, %v1226
        %v1298 = vadd.f32 %v1212, %v1229
        %vm1299 = vcmp.eq.s32.totalorder %v502, %v1251
        %vm1300 = vcmp.eq.s32.totalorder %v502, %v1265
        %vm1301 = vcmp.eq.s32.totalorder %v502, %v1279
        %vm1302 = vcmp.eq.s32.totalorder %v502, %v1294
        %v1303 = vsel %vm1299, -inf, %v1217
        %v1304 = vsel %vm1300, -inf, %v1218
        %v1305 = vsel %vm1301, -inf, %v1219
        %v1306 = vsel %vm1302, -inf, %v1220
        %1307 = vmax.xlane.f32.xlu0 %v1303
        %v1308 = vpop.xlane.xlu0 %1307
        %1309 = vmax.xlane.f32.xlu0 %v1304
        %v1310 = vpop.xlane.xlu0 %1309
        %1311 = vmax.xlane.f32.xlu0 %v1305
        %v1312 = vpop.xlane.xlu0 %1311
        %v1313 = vsel %vm514, %v1306, -inf
        %1314 = vmax.xlane.f32.xlu0 %v1313
        %v1315 = vpop.xlane.xlu0 %1314
        %v1316 = vadd.f32 %v1295, %v1308
        %v1317 = vadd.f32 %v1296, %v1310
        %v1318 = vadd.f32 %v1297, %v1312
        %v1319 = vadd.f32 %v1298, %v1315
        %v1320 = vsel %vm694, %v1316, 0.0
        %v1321 = vsel %vm694, %v1317, 0.0
        %v1322 = vadd.f32 %v1320, %v1321
        %v1323 = vsel %vm694, %v1318, 0.0
        %v1324 = vadd.f32 %v1322, %v1323
        %v1325 = vsel %vm700, %v1319, 0.0
        %v1326 = vadd.f32 %v1324, %v1325
        %1327 = vadd.xlane.f32.xlu0 %v1326
        %v1328 = vpop.xlane.xlu0 %1327
        %v1329 = vrot.slane %v1328, 4
        %v1330 = vadd.f32 %v1328, %v1329
        %v1331 = vrot.slane %v1330, 2
        %v1332 = vadd.f32 %v1330, %v1331
        %v1333 = vrot.slane %v1332, 1
        %v1334 = vadd.f32 %v1332, %v1333
        %s1335 = vtos %v1334
        %vm1336 = vcmp.eq.s32.totalorder %v502, 3
        %v1337 = vstv %s1335
        %v1338 = vsel %vm1336, %v1337, %v1130
        %v1339 = vsel %vm503, %v483, -inf
        %v1340 = vsel %vm503, %v488, -inf
        %v1341 = vsel %vm503, %v493, -inf
        %v1342 = vsel %vm503, %v498, -inf
        %1343 = vmax.xlane.f32.xlu0 %v1339
        %v1344 = vpop.xlane.xlu0 %1343
        %1345 = vmax.xlane.f32.xlu0 %v1340
        %v1346 = vpop.xlane.xlu0 %1345
        %1347 = vmax.xlane.f32.xlu0 %v1341
        %v1348 = vpop.xlane.xlu0 %1347
        %v1349 = vsel %vm514, %v1342, -inf
        %1350 = vmax.xlane.f32.xlu0 %v1349
        %v1351 = vpop.xlane.xlu0 %1350
        %vm1352 = vcmp.eq.f32.partialorder %v1339, %v1344
        %vm1353 = vcmp.eq.f32.partialorder %v1340, %v1346
        %vm1354 = vcmp.eq.f32.partialorder %v1341, %v1348
        %vm1355 = vcmp.eq.f32.partialorder %v1342, %v1351
        %v1356 = vsel %vm1352, %v502, 1073741824
        %v1357 = vsel %vm1353, %v502, 1073741824
        %v1358 = vsel %vm1354, %v502, 1073741824
        %v1359 = vsel %vm1355, %v502, 1073741824
        %v1360 = vand.u32 %v1356, 65535
        %v1361 = vshra.s32 %v1356, 16
        %v1362 = vcvt.s32.f32 %v1360
        %v1363 = vcvt.s32.f32 %v1361
        %1364 = vmin.xlane.f32.xlu0 %v1363
        %v1365 = vpop.xlane.xlu0 %1364
        %vm1366 = vcmp.eq.f32.partialorder %v1363, %v1365
        %v1367 = vsel %vm1366, %v1362, inf
        %1368 = vmin.xlane.f32.xlu0 %v1367
        %v1369 = vpop.xlane.xlu0 %1368
        %v1370 = vcvt.f32.s32 %v1369
        %v1371 = vcvt.f32.s32 %v1365
        %v1372 = vshll.u32 %v1371, 16
        %v1373 = vadd.s32 %v1372, %v1370
        %v1374 = vand.u32 %v1357, 65535
        %v1375 = vshra.s32 %v1357, 16
        %v1376 = vcvt.s32.f32 %v1374
        %v1377 = vcvt.s32.f32 %v1375
        %1378 = vmin.xlane.f32.xlu0 %v1377
        %v1379 = vpop.xlane.xlu0 %1378
        %vm1380 = vcmp.eq.f32.partialorder %v1377, %v1379
        %v1381 = vsel %vm1380, %v1376, inf
        %1382 = vmin.xlane.f32.xlu0 %v1381
        %v1383 = vpop.xlane.xlu0 %1382
        %v1384 = vcvt.f32.s32 %v1383
        %v1385 = vcvt.f32.s32 %v1379
        %v1386 = vshll.u32 %v1385, 16
        %v1387 = vadd.s32 %v1386, %v1384
        %v1388 = vand.u32 %v1358, 65535
        %v1389 = vshra.s32 %v1358, 16
        %v1390 = vcvt.s32.f32 %v1388
        %v1391 = vcvt.s32.f32 %v1389
        %1392 = vmin.xlane.f32.xlu0 %v1391
        %v1393 = vpop.xlane.xlu0 %1392
        %vm1394 = vcmp.eq.f32.partialorder %v1391, %v1393
        %v1395 = vsel %vm1394, %v1390, inf
        %1396 = vmin.xlane.f32.xlu0 %v1395
        %v1397 = vpop.xlane.xlu0 %1396
        %v1398 = vcvt.f32.s32 %v1397
        %v1399 = vcvt.f32.s32 %v1393
        %v1400 = vshll.u32 %v1399, 16
        %v1401 = vadd.s32 %v1400, %v1398
        %v1402 = vsel %vm514, %v1359, 2147483647
        %v1403 = vand.u32 %v1402, 65535
        %v1404 = vshra.s32 %v1402, 16
        %v1405 = vcvt.s32.f32 %v1403
        %v1406 = vcvt.s32.f32 %v1404
        %1407 = vmin.xlane.f32.xlu0 %v1406
        %v1408 = vpop.xlane.xlu0 %1407
        %vm1409 = vcmp.eq.f32.partialorder %v1406, %v1408
        %v1410 = vsel %vm1409, %v1405, inf
        %1411 = vmin.xlane.f32.xlu0 %v1410
        %v1412 = vpop.xlane.xlu0 %1411
        %v1413 = vcvt.f32.s32 %v1412
        %v1414 = vcvt.f32.s32 %v1408
        %v1415 = vshll.u32 %v1414, 16
        %v1416 = vadd.s32 %v1415, %v1413
        %v1417 = vadd.f32 %v1344, 0.0
        %v1418 = vadd.f32 %v1346, 0.0
        %v1419 = vadd.f32 %v1348, 0.0
        %v1420 = vadd.f32 %v1351, 0.0
        %vm1421 = vcmp.eq.s32.totalorder %v502, %v1373
        %vm1422 = vcmp.eq.s32.totalorder %v502, %v1387
        %vm1423 = vcmp.eq.s32.totalorder %v502, %v1401
        %vm1424 = vcmp.eq.s32.totalorder %v502, %v1416
        %v1425 = vsel %vm1421, -inf, %v1339
        %v1426 = vsel %vm1422, -inf, %v1340
        %v1427 = vsel %vm1423, -inf, %v1341
        %v1428 = vsel %vm1424, -inf, %v1342
        %1429 = vmax.xlane.f32.xlu0 %v1425
        %v1430 = vpop.xlane.xlu0 %1429
        %1431 = vmax.xlane.f32.xlu0 %v1426
        %v1432 = vpop.xlane.xlu0 %1431
        %1433 = vmax.xlane.f32.xlu0 %v1427
        %v1434 = vpop.xlane.xlu0 %1433
        %v1435 = vsel %vm514, %v1428, -inf
        %1436 = vmax.xlane.f32.xlu0 %v1435
        %v1437 = vpop.xlane.xlu0 %1436
        %vm1438 = vcmp.eq.f32.partialorder %v1425, %v1430
        %vm1439 = vcmp.eq.f32.partialorder %v1426, %v1432
        %vm1440 = vcmp.eq.f32.partialorder %v1427, %v1434
        %vm1441 = vcmp.eq.f32.partialorder %v1428, %v1437
        %v1442 = vsel %vm1438, %v502, 1073741824
        %v1443 = vsel %vm1439, %v502, 1073741824
        %v1444 = vsel %vm1440, %v502, 1073741824
        %v1445 = vsel %vm1441, %v502, 1073741824
        %v1446 = vand.u32 %v1442, 65535
        %v1447 = vshra.s32 %v1442, 16
        %v1448 = vcvt.s32.f32 %v1446
        %v1449 = vcvt.s32.f32 %v1447
        %1450 = vmin.xlane.f32.xlu0 %v1449
        %v1451 = vpop.xlane.xlu0 %1450
        %vm1452 = vcmp.eq.f32.partialorder %v1449, %v1451
        %v1453 = vsel %vm1452, %v1448, inf
        %1454 = vmin.xlane.f32.xlu0 %v1453
        %v1455 = vpop.xlane.xlu0 %1454
        %v1456 = vcvt.f32.s32 %v1455
        %v1457 = vcvt.f32.s32 %v1451
        %v1458 = vshll.u32 %v1457, 16
        %v1459 = vadd.s32 %v1458, %v1456
        %v1460 = vand.u32 %v1443, 65535
        %v1461 = vshra.s32 %v1443, 16
        %v1462 = vcvt.s32.f32 %v1460
        %v1463 = vcvt.s32.f32 %v1461
        %1464 = vmin.xlane.f32.xlu0 %v1463
        %v1465 = vpop.xlane.xlu0 %1464
        %vm1466 = vcmp.eq.f32.partialorder %v1463, %v1465
        %v1467 = vsel %vm1466, %v1462, inf
        %1468 = vmin.xlane.f32.xlu0 %v1467
        %v1469 = vpop.xlane.xlu0 %1468
        %v1470 = vcvt.f32.s32 %v1469
        %v1471 = vcvt.f32.s32 %v1465
        %v1472 = vshll.u32 %v1471, 16
        %v1473 = vadd.s32 %v1472, %v1470
        %v1474 = vand.u32 %v1444, 65535
        %v1475 = vshra.s32 %v1444, 16
        %v1476 = vcvt.s32.f32 %v1474
        %v1477 = vcvt.s32.f32 %v1475
        %1478 = vmin.xlane.f32.xlu0 %v1477
        %v1479 = vpop.xlane.xlu0 %1478
        %vm1480 = vcmp.eq.f32.partialorder %v1477, %v1479
        %v1481 = vsel %vm1480, %v1476, inf
        %1482 = vmin.xlane.f32.xlu0 %v1481
        %v1483 = vpop.xlane.xlu0 %1482
        %v1484 = vcvt.f32.s32 %v1483
        %v1485 = vcvt.f32.s32 %v1479
        %v1486 = vshll.u32 %v1485, 16
        %v1487 = vadd.s32 %v1486, %v1484
        %v1488 = vsel %vm514, %v1445, 2147483647
        %v1489 = vand.u32 %v1488, 65535
        %v1490 = vshra.s32 %v1488, 16
        %v1491 = vcvt.s32.f32 %v1489
        %v1492 = vcvt.s32.f32 %v1490
        %1493 = vmin.xlane.f32.xlu0 %v1492
        %v1494 = vpop.xlane.xlu0 %1493
        %vm1495 = vcmp.eq.f32.partialorder %v1492, %v1494
        %v1496 = vsel %vm1495, %v1491, inf
        %1497 = vmin.xlane.f32.xlu0 %v1496
        %v1498 = vpop.xlane.xlu0 %1497
        %v1499 = vcvt.f32.s32 %v1498
        %v1500 = vcvt.f32.s32 %v1494
        %v1501 = vshll.u32 %v1500, 16
        %v1502 = vadd.s32 %v1501, %v1499
        %v1503 = vadd.f32 %v1417, %v1430
        %v1504 = vadd.f32 %v1418, %v1432
        %v1505 = vadd.f32 %v1419, %v1434
        %v1506 = vadd.f32 %v1420, %v1437
        %vm1507 = vcmp.eq.s32.totalorder %v502, %v1459
        %vm1508 = vcmp.eq.s32.totalorder %v502, %v1473
        %vm1509 = vcmp.eq.s32.totalorder %v502, %v1487
        %vm1510 = vcmp.eq.s32.totalorder %v502, %v1502
        %v1511 = vsel %vm1507, -inf, %v1425
        %v1512 = vsel %vm1508, -inf, %v1426
        %v1513 = vsel %vm1509, -inf, %v1427
        %v1514 = vsel %vm1510, -inf, %v1428
        %1515 = vmax.xlane.f32.xlu0 %v1511
        %v1516 = vpop.xlane.xlu0 %1515
        %1517 = vmax.xlane.f32.xlu0 %v1512
        %v1518 = vpop.xlane.xlu0 %1517
        %1519 = vmax.xlane.f32.xlu0 %v1513
        %v1520 = vpop.xlane.xlu0 %1519
        %v1521 = vsel %vm514, %v1514, -inf
        %1522 = vmax.xlane.f32.xlu0 %v1521
        %v1523 = vpop.xlane.xlu0 %1522
        %v1524 = vadd.f32 %v1503, %v1516
        %v1525 = vadd.f32 %v1504, %v1518
        %v1526 = vadd.f32 %v1505, %v1520
        %v1527 = vadd.f32 %v1506, %v1523
        %v1528 = vsel %vm694, %v1524, 0.0
        %v1529 = vsel %vm694, %v1525, 0.0
        %v1530 = vadd.f32 %v1528, %v1529
        %v1531 = vsel %vm694, %v1526, 0.0
        %v1532 = vadd.f32 %v1530, %v1531
        %v1533 = vsel %vm700, %v1527, 0.0
        %v1534 = vadd.f32 %v1532, %v1533
        %1535 = vadd.xlane.f32.xlu0 %v1534
        %v1536 = vpop.xlane.xlu0 %1535
        %v1537 = vrot.slane %v1536, 4
        %v1538 = vadd.f32 %v1536, %v1537
        %v1539 = vrot.slane %v1538, 2
        %v1540 = vadd.f32 %v1538, %v1539
        %v1541 = vrot.slane %v1540, 1
        %v1542 = vadd.f32 %v1540, %v1541
        %s1543 = vtos %v1542
        %vm1544 = vcmp.eq.s32.totalorder %v502, 4
        %v1545 = vstv %s1543
        %v1546 = vsel %vm1544, %v1545, %v1338
        %vm1547 = vcmask 32768
        %1548 = vst.msk [vmem:[%s150] sm:$0x1] %vm1547, %v1546
        %s1549 = sand.u32 %s72, 1
        %s1550 = scalar_lea.sflag [#allocation4], %s1549
        %s1551 = sand.u32 %s72, 1
        %s1552 = scalar_lea.vmem [#allocation5], %s1551
        // Predicated region
        $region33: #{tpu_custom_call.1} parent=27 // pred_check
          %p1553 = pneg %p82
        $region34: #{tpu_custom_call.1} parent=27 // pred_check_branch
          %1555 = sbr.rel (%p1553) target = $region36
        $region35: #{tpu_custom_call.1} parent=27 // pred_region
          %s1557 = ssub.s32 16, 16
          %1558 = vsyncadd %s1550, %s1557
          %s1559 = smul.addr %s17, 16
          %s1560 = scalar_lea.hbm %s2, %s1559
          %s1562 = sshll.u32 %s1552, 4
          %s1563 = int_to_ptr.vmem [resolvable:$true] %s1562
          %1565 = dma.vmem_to_hbm [thread:$0]  %s1563, 16, %s1560, %s1550
        $region36: #{tpu_custom_call.1} parent=27 // pred_fallthru
          _
      $region28: #{tpu_custom_call.1} parent=5 // pred_fallthru
        _
      %p1566 = scmp.le.s32.totalorder 2, %s12
      // Predicated region
      $region37: #{tpu_custom_call.1} parent=5 // pred_check
        %p1567 = pneg %p1566
      $region38: #{tpu_custom_call.1} parent=5 // pred_check_branch
        %1569 = sbr.rel (%p1567) target = $region40
      $region39: #{tpu_custom_call.1} parent=5 // pred_region
        %s1570 = ssub.s32 %s12, 2
        // Predicated region
        $region41: #{tpu_custom_call.1} parent=39 // pred_check
          %p1571 = pneg %p88
        $region42: #{tpu_custom_call.1} parent=39 // pred_check_branch
          %1573 = sbr.rel (%p1571) target = $region44
        $region43: #{tpu_custom_call.1} parent=39 // pred_region
          %s1574 = sand.u32 %s73, 1
          %s1575 = scalar_lea.sflag [#allocation4], %s1574
          %s1576 = sand.u32 %s73, 1
          %s1577 = scalar_lea.vmem [#allocation5], %s1576
          %1578 = dma.done %s1575, 16
        $region44: #{tpu_custom_call.1} parent=39 // pred_fallthru
          _
      $region40: #{tpu_custom_call.1} parent=5 // pred_fallthru
        _
    $region6: #{tpu_custom_call.1} parent=1 // loop_footer
      %s16 = sadd.s32 1, %s12
    $region7: #{tpu_custom_call.1} parent=1 // loop_footer_branch
      %11 = sbr.rel target = $region3
    $region8: #{tpu_custom_call.1} parent=1 // loop_exit
      _
    %1579 = vsyncpa [#allocation3], 1
    %s1580 = scalar_lea.sflag [#allocation3], 1
    %1581 = vsyncpa %s1580, 1
    %1582 = vsyncpa [#allocation4], 1
    %s1583 = scalar_lea.sflag [#allocation4], 1
    %1584 = vsyncpa %s1583, 1

</llo_original>
